<compile_context>
chip_gen: v7x
topology: tpu7x:2x2x1
jax: 0.10.0
libtpu: 0.0.40
codegen_flags: <defaults>
</compile_context>

<pallas_src>
import functools

import numpy as np
import jax
import jax.numpy as jnp
from jax import lax
from jax.experimental import pallas as pl
from jax.experimental.pallas import tpu as pltpu


def _vmem():
    return pl.BlockSpec(memory_space=pltpu.MemorySpace.VMEM)


# ----------------------------------------------------------------------------
# Kernel 1: fused preprocess (node projection + edge network)
# ----------------------------------------------------------------------------
def _prep_kernel(nf_ref, ef_ref, pw_ref, pb_ref, w1_ref, b1_ref, w2_ref, b2_ref,
                 h0_ref, ew_ref):
    # project_node_feats: Linear + ReLU
    h0 = jnp.dot(nf_ref[...].astype(jnp.bfloat16), pw_ref[...],
                 preferred_element_type=jnp.float32) + pb_ref[...]
    h0_ref[...] = jnp.maximum(h0, 0.0)
    # edge network: Linear + ReLU + Linear -> (E, D*D), stored bf16
    e = jnp.dot(ef_ref[...].astype(jnp.bfloat16), w1_ref[...],
                preferred_element_type=jnp.float32) + b1_ref[...]
    e = jnp.maximum(e, 0.0)
    ew = jnp.dot(e.astype(jnp.bfloat16), w2_ref[...],
                 preferred_element_type=jnp.float32) + b2_ref[...]
    ew_ref[...] = ew.astype(ew_ref.dtype)


# ----------------------------------------------------------------------------
# Kernel 2: fused message passing (NNConv(sum)+bias+ReLU then GRU), in-kernel loop
# ----------------------------------------------------------------------------
def _mp_kernel(h0_ref, ew3_ref, src_ref, dstT_ref, cb_ref,
               gwx_ref, gwh_ref, gbx_ref, gbh_ref, h_ref, *, D, n_steps):
    # Loop-invariant operands loaded once (weights / one-hots stay bf16).
    ew3 = ew3_ref[...]      # (E, D, D) bf16 per-edge NNConv weights
    src = src_ref[...]      # (E, V) bf16 one-hot
    dstT = dstT_ref[...]    # (V, E) bf16 one-hot^T
    cb = cb_ref[...]        # (1, D) f32 NNConv bias
    gwx = gwx_ref[...]      # (D, 3D) bf16  GRU input weights  [r|z|n]
    gwh = gwh_ref[...]      # (D, 3D) bf16  GRU hidden weights [r|z|n]
    gbx = gbx_ref[...]      # (1, 3D) f32
    gbh = gbh_ref[...]      # (1, 3D) f32

    def step(_, h):
        h_bf = h.astype(jnp.bfloat16)
        # gather source-node features per edge (one-hot matmul, MXU)
        h_src = jnp.dot(src, h_bf, preferred_element_type=jnp.float32)      # (E, D)
        # per-edge message m_e = h_src[e] @ W_e : bf16 batched MXU dot_general
        msg = lax.dot_general(h_src.astype(jnp.bfloat16), ew3,
                              dimension_numbers=(((1,), (1,)), ((0,), (0,))),
                              preferred_element_type=jnp.float32)            # (E, D)
        # scatter-add into destination nodes (one-hot matmul, MXU)
        agg = jnp.dot(dstT, msg.astype(jnp.bfloat16),
                      preferred_element_type=jnp.float32)                    # (V, D)
        x = jnp.maximum(agg + cb, 0.0)                                       # bias + ReLU

        # GRU cell, split x / h matmuls (no lane-dim concat); gates stacked [r|z|n]
        gx = jnp.dot(x.astype(jnp.bfloat16), gwx,
                     preferred_element_type=jnp.float32) + gbx               # (V, 3D)
        gh = jnp.dot(h_bf, gwh, preferred_element_type=jnp.float32) + gbh    # (V, 3D)
        r = jax.nn.sigmoid(gx[:, 0:D] + gh[:, 0:D])
        z = jax.nn.sigmoid(gx[:, D:2 * D] + gh[:, D:2 * D])
        n = jnp.tanh(gx[:, 2 * D:3 * D] + r * gh[:, 2 * D:3 * D])
        return (1.0 - z) * n + z * h

    h_ref[...] = lax.fori_loop(0, n_steps, step, h0_ref[...], unroll=True)


# ----------------------------------------------------------------------------
# Kernel 3: fused Set2Set (stacked LSTM + segment-softmax attention) + MLP head
# ----------------------------------------------------------------------------
def _s2s_head_kernel(feat_ref, mem_ref, memt_ref, *rest, D, L, n_steps):
    n_lstm_refs = 4 + 3 * (L - 1)
    lstm_refs = rest[:n_lstm_refs]
    (pwq_ref, pwr_ref, pb_ref,
     w1_ref, b1_ref, w2_ref, b2_ref, w3_ref, b3_ref) = rest[n_lstm_refs:n_lstm_refs + 9]
    y_ref = rest[n_lstm_refs + 9]

    feat = feat_ref[...]                       # (V, D) f32 node features
    mem_bf = mem_ref[...]                      # (V, G) bf16 one-hot membership
    memt_bf = memt_ref[...]                    # (G, V) bf16
    mem = mem_bf.astype(jnp.float32)           # f32 mask, cast once (hoisted)

    # load LSTM weights once (layer 0 has split q / readout input weights)
    lstm = []
    idx = 0
    for layer in range(L):
        if layer == 0:
            lstm.append((lstm_refs[idx][...], lstm_refs[idx + 1][...],
                         lstm_refs[idx + 2][...], lstm_refs[idx + 3][...]))
            idx += 4
        else:
            lstm.append((lstm_refs[idx][...], lstm_refs[idx + 1][...],
                         lstm_refs[idx + 2][...]))
            idx += 3

    G = mem_bf.shape[1]
    zero_gd = jnp.zeros((G, D), jnp.float32)
    # carry = (q, readout, h[0..L-1], c[0..L-1]);  q_star = [q | readout] is implicit
    init = (zero_gd, zero_gd, (zero_gd,) * L, (zero_gd,) * L)

    def step(_, carry):
        q_prev, r_prev, hs, cs = carry
        q_bf = q_prev.astype(jnp.bfloat16)
        r_bf = r_prev.astype(jnp.bfloat16)

        # stacked LSTM, seq-len 1; layer 0 consumes [q | readout] via split weights
        new_hs, new_cs = [], []
        x_bf = None
        for layer in range(L):
            h = hs[layer]
            c = cs[layer]
            h_bf = h.astype(jnp.bfloat16)
            if layer == 0:
                wq, wr, wh, b = lstm[0]
                g = (jnp.dot(q_bf, wq, preferred_element_type=jnp.float32)
                     + jnp.dot(r_bf, wr, preferred_element_type=jnp.float32)
                     + jnp.dot(h_bf, wh, preferred_element_type=jnp.float32) + b)
            else:
                wx, wh, b = lstm[layer]
                g = (jnp.dot(x_bf, wx, preferred_element_type=jnp.float32)
                     + jnp.dot(h_bf, wh, preferred_element_type=jnp.float32) + b)
            i = jax.nn.sigmoid(g[:, 0:D])
            f = jax.nn.sigmoid(g[:, D:2 * D])
            gg = jnp.tanh(g[:, 2 * D:3 * D])
            o = jax.nn.sigmoid(g[:, 3 * D:4 * D])
            c_new = f * c + i * gg
            h_new = o * jnp.tanh(c_new)
            new_hs.append(h_new)
            new_cs.append(c_new)
            x_bf = h_new.astype(jnp.bfloat16)
        q = new_hs[-1]                                                      # (G, D) f32

        # segment softmax attention + weighted readout (bf16 one-hot MXU matmuls)
        qb = jnp.dot(mem_bf, x_bf, preferred_element_type=jnp.float32)      # (V, D)
        e = jnp.sum(feat * qb, axis=-1, keepdims=True)                      # (V, 1)
        masked = mem * e + (1.0 - mem) * (-1e30)                            # (V, G)
        gmax = jnp.max(masked, axis=0, keepdims=True)                       # (1, G)
        maxb = jnp.sum(mem * gmax, axis=1, keepdims=True)                   # (V, 1)
        expv = jnp.exp(e - maxb)                                            # (V, 1)
        denom = jnp.dot(memt_bf, expv.astype(jnp.bfloat16),
                        preferred_element_type=jnp.float32)                 # (G, 1)
        denomb = jnp.dot(mem_bf, denom.astype(jnp.bfloat16),
                         preferred_element_type=jnp.float32)                # (V, 1)
        alpha = expv * pl.reciprocal(denomb, approx=True)                   # (V, 1)
        readout = jnp.dot(memt_bf, (feat * alpha).astype(jnp.bfloat16),
                          preferred_element_type=jnp.float32)               # (G, D)
        return q, readout, tuple(new_hs), tuple(new_cs)

    q_fin, r_fin, _, _ = lax.fori_loop(0, n_steps, step, init, unroll=True)

    # head: encoder.process (Linear+ReLU, Dropout = identity) + predict 3-layer MLP
    def lin(x, w_ref, b_ref, relu):
        y = jnp.dot(x.astype(jnp.bfloat16), w_ref[...],
                    preferred_element_type=jnp.float32) + b_ref[...]
        return jnp.maximum(y, 0.0) if relu else y

    g = jnp.maximum(
        jnp.dot(q_fin.astype(jnp.bfloat16), pwq_ref[...],
                preferred_element_type=jnp.float32)
        + jnp.dot(r_fin.astype(jnp.bfloat16), pwr_ref[...],
                  preferred_element_type=jnp.float32)
        + pb_ref[...], 0.0)
    y = lin(g, w1_ref, b1_ref, True)
    y = lin(y, w2_ref, b2_ref, True)
    y_ref[...] = lin(y, w3_ref, b3_ref, False).astype(y_ref.dtype)


# ----------------------------------------------------------------------------
# Parameter construction (deterministic, PyTorch-style uniform init, split layouts)
# ----------------------------------------------------------------------------
def _uni(key, shape, bound):
    return jax.random.uniform(key, shape, jnp.float32, -bound, bound)


def make_params(key, node_in, edge_in, D, EH, n_lstm_layers, n_tasks):
    ks = iter(jax.random.split(key, 64))
    p = {}

    def lin(out_f, in_f):
        b = 1.0 / np.sqrt(in_f)
        w = _uni(next(ks), (out_f, in_f), b)          # PyTorch (out, in) layout
        bias = _uni(next(ks), (out_f,), b)
        return w.T.astype(jnp.bfloat16), bias.reshape(1, out_f)

    # MPNNGNN
    p["proj_w"], p["proj_b"] = lin(D, node_in)        # project_node_feats
    p["e1_w"], p["e1_b"] = lin(EH, edge_in)           # edge network L1
    p["e2_w"], p["e2_b"] = lin(D * D, EH)             # edge network L2
    p["conv_b"] = _uni(next(ks), (1, D), 1.0 / np.sqrt(D))   # NNConv bias

    # GRU: split x / h weights, gate-stacked columns [r | z | n]
    kg = 1.0 / np.sqrt(D)
    wih = _uni(next(ks), (3 * D, D), kg)
    whh = _uni(next(ks), (3 * D, D), kg)
    bih = _uni(next(ks), (3 * D,), kg)
    bhh = _uni(next(ks), (3 * D,), kg)
    p["gru_wx"] = wih.T.astype(jnp.bfloat16)          # (D, 3D)
    p["gru_wh"] = whh.T.astype(jnp.bfloat16)          # (D, 3D)
    p["gru_bx"] = bih.reshape(1, 3 * D)
    p["gru_bh"] = bhh.reshape(1, 3 * D)

    # Set2Set LSTM (input 2D -> hidden D), split weights, folded biases.
    # Layer 0's input weight is split into the q-part and readout-part so the
    # kernel never has to concatenate q_star = [q | readout] along lanes.
    p["lstm"] = []
    for layer in range(n_lstm_layers):
        in_f = 2 * D if layer == 0 else D
        kl = 1.0 / np.sqrt(D)
        lwih = _uni(next(ks), (4 * D, in_f), kl)      # rows [i; f; g; o]
        lwhh = _uni(next(ks), (4 * D, D), kl)
        lbih = _uni(next(ks), (4 * D,), kl)
        lbhh = _uni(next(ks), (4 * D,), kl)
        b = (lbih + lbhh).reshape(1, 4 * D)
        wh = lwhh.T.astype(jnp.bfloat16)              # (D, 4D)
        if layer == 0:
            wq = lwih[:, 0:D].T.astype(jnp.bfloat16)          # (D, 4D) q half
            wr = lwih[:, D:2 * D].T.astype(jnp.bfloat16)      # (D, 4D) readout half
            p["lstm"].append((wq, wr, wh, b))
        else:
            wx = lwih.T.astype(jnp.bfloat16)                  # (D, 4D)
            p["lstm"].append((wx, wh, b))

    # encoder.process (2D -> D), split into q / readout halves (no lane concat)
    kp = 1.0 / np.sqrt(2 * D)
    pw = _uni(next(ks), (D, 2 * D), kp)
    pb = _uni(next(ks), (D,), kp)
    p["proc_wq"] = pw[:, 0:D].T.astype(jnp.bfloat16)
    p["proc_wr"] = pw[:, D:2 * D].T.astype(jnp.bfloat16)
    p["proc_b"] = pb.reshape(1, D)

    # predict head
    p["p1_w"], p["p1_b"] = lin(D, D)
    p["p2_w"], p["p2_b"] = lin(D, D)
    p["p3_w"], p["p3_b"] = lin(n_tasks, D)
    return p


# ----------------------------------------------------------------------------
# Forward pass: 3 fused single-invocation pallas_calls
# ----------------------------------------------------------------------------
def custom_mpnn_predictor_forward(params, node_feats, edge_feats,
                                  src_oh, dst_oh_t, member_oh, member_oh_t,
                                  *, D, n_mp_steps, n_s2s_steps, n_lstm_layers):
    V = node_feats.shape[0]
    E = edge_feats.shape[0]
    G = member_oh.shape[1]
    n_tasks = params["p3_w"].shape[1]
    L = n_lstm_layers

    # --- 1. preprocess: node projection + edge network ---
    h0, ew = pl.pallas_call(
        _prep_kernel,
        out_shape=(jax.ShapeDtypeStruct((V, D), jnp.float32),
                   jax.ShapeDtypeStruct((E, D * D), jnp.bfloat16)),
        in_specs=[_vmem()] * 8,
        out_specs=(_vmem(), _vmem()),
    )(node_feats, edge_feats, params["proj_w"], params["proj_b"],
      params["e1_w"], params["e1_b"], params["e2_w"], params["e2_b"])
    ew3 = ew.reshape(E, D, D)      # XLA-side reshape; consumed as bf16 (E, D, D)

    # --- 2. fused message-passing loop (unrolled in-kernel fori_loop) ---
    h = pl.pallas_call(
        functools.partial(_mp_kernel, D=D, n_steps=n_mp_steps),
        out_shape=jax.ShapeDtypeStruct((V, D), jnp.float32),
        in_specs=[_vmem()] * 9,
        out_specs=_vmem(),
    )(h0, ew3, src_oh, dst_oh_t, params["conv_b"],
      params["gru_wx"], params["gru_wh"], params["gru_bx"], params["gru_bh"])

    # --- 3. fused Set2Set readout + process/predict head ---
    lstm_args = []
    for layer in range(L):
        lstm_args += list(params["lstm"][layer])
    n_in = 3 + len(lstm_args) + 9
    y = pl.pallas_call(
        functools.partial(_s2s_head_kernel, D=D, L=L, n_steps=n_s2s_steps),
        out_shape=jax.ShapeDtypeStruct((G, n_tasks), jnp.float32),
        in_specs=[_vmem()] * n_in,
        out_specs=_vmem(),
    )(h, member_oh, member_oh_t, *lstm_args,
      params["proc_wq"], params["proc_wr"], params["proc_b"],
      params["p1_w"], params["p1_b"], params["p2_w"], params["p2_b"],
      params["p3_w"], params["p3_b"])
    return y


# ----------------------------------------------------------------------------
# Main
# ----------------------------------------------------------------------------
if __name__ == "__main__":
    NODE_IN, EDGE_IN = 16, 8
    D, EH = 64, 128                      # node_out_feats, edge_hidden_feats (defaults)
    N_MP, N_S2S, N_LSTM = 6, 6, 3        # message passing / set2set steps / layers
    N_TASKS = 1

    # Small batch of 2 graphs, 6 nodes each.
    V, G = 12, 2
    node2graph = np.array([0] * 6 + [1] * 6, dtype=np.int32)
    src_list, dst_list = [], []
    for off in (0, 6):
        ring = [(0, 1), (1, 2), (2, 3), (3, 4), (4, 5), (5, 0), (0, 3), (1, 4),
                (2, 5), (4, 0)]
        for s, d in ring:
            src_list.append(s + off)
            dst_list.append(d + off)
    src = np.array(src_list, dtype=np.int32)
    dst = np.array(dst_list, dtype=np.int32)
    E = src.shape[0]                      # 20 edges

    key = jax.random.PRNGKey(0)
    k_node, k_edge, k_param = jax.random.split(key, 3)
    node_feats = jax.random.normal(k_node, (V, NODE_IN), jnp.float32)
    edge_feats = jax.random.normal(k_edge, (E, EDGE_IN), jnp.float32)

    # Dense one-hot graph structure pre-cast to bf16 (0/1 are exact in bf16);
    # gather / scatter / segment ops become bf16 MXU matmuls in the kernels.
    src_oh = jax.nn.one_hot(src, V, dtype=jnp.bfloat16)               # (E, V)
    dst_oh_t = jax.nn.one_hot(dst, V, dtype=jnp.bfloat16).T           # (V, E)
    member_oh = jax.nn.one_hot(node2graph, G, dtype=jnp.bfloat16)     # (V, G)
    member_oh_t = member_oh.T                                         # (G, V)

    params = make_params(k_param, NODE_IN, EDGE_IN, D, EH, N_LSTM, N_TASKS)

    out = custom_mpnn_predictor_forward(
        params, node_feats, edge_feats, src_oh, dst_oh_t, member_oh, member_oh_t,
        D=D, n_mp_steps=N_MP, n_s2s_steps=N_S2S, n_lstm_layers=N_LSTM)
    out = jax.block_until_ready(out)
    assert out.shape == (G, N_TASKS) and out.dtype == jnp.float32
    assert bool(jnp.all(jnp.isfinite(out)))
    print("KERNEL_OK")
</pallas_src>

<mosaic_0001>
module attributes {stable_mosaic.version = 11 : i64} {
  func.func @_prep_kernel(%arg0: memref<12x16xf32, #tpu.memory_space<vmem>>, %arg1: memref<20x8xf32, #tpu.memory_space<vmem>>, %arg2: memref<16x64xbf16, #tpu.memory_space<vmem>>, %arg3: memref<1x64xf32, #tpu.memory_space<vmem>>, %arg4: memref<8x128xbf16, #tpu.memory_space<vmem>>, %arg5: memref<1x128xf32, #tpu.memory_space<vmem>>, %arg6: memref<128x4096xbf16, #tpu.memory_space<vmem>>, %arg7: memref<1x4096xf32, #tpu.memory_space<vmem>>, %arg8: memref<12x64xf32, #tpu.memory_space<vmem>>, %arg9: memref<20x4096xbf16, #tpu.memory_space<vmem>>) attributes {dimension_semantics = [], scalar_prefetch = 0 : i64, scratch_operands = 0 : i64, tpu.core_type = #tpu.core_type<tc>} {
    %c0 = arith.constant 0 : index
    %c0_0 = arith.constant 0 : index
    %0 = vector.load %arg0[%c0, %c0_0] : memref<12x16xf32, #tpu.memory_space<vmem>>, vector<12x16xf32>
    %1 = arith.truncf %0 : vector<12x16xf32> to vector<12x16xbf16>
    %c0_1 = arith.constant 0 : index
    %c0_2 = arith.constant 0 : index
    %2 = vector.load %arg2[%c0_1, %c0_2] : memref<16x64xbf16, #tpu.memory_space<vmem>>, vector<16x64xbf16>
    %cst = arith.constant dense<0.000000e+00> : vector<12x64xf32>
    %3 = tpu.matmul %1, %2, %cst {dimension_numbers = #tpu.dot_dimension_numbers<[1], [0], [0], [1], [0, 0, 1, 1], [], []>} : vector<12x16xbf16>, vector<16x64xbf16>, vector<12x64xf32> -> vector<12x64xf32>
    %c0_3 = arith.constant 0 : index
    %c0_4 = arith.constant 0 : index
    %4 = vector.load %arg3[%c0_3, %c0_4] : memref<1x64xf32, #tpu.memory_space<vmem>>, vector<1x64xf32>
    %5 = vector.broadcast %4 : vector<1x64xf32> to vector<12x64xf32>
    %6 = arith.addf %3, %5 : vector<12x64xf32>
    %cst_5 = arith.constant 0.000000e+00 : f32
    %7 = vector.broadcast %cst_5 : f32 to vector<12x64xf32>
    %8 = arith.maximumf %6, %7 : vector<12x64xf32>
    %c0_6 = arith.constant 0 : index
    %c0_7 = arith.constant 0 : index
    %9 = vector.load %arg8[%c0_6, %c0_7] : memref<12x64xf32, #tpu.memory_space<vmem>>, vector<12x64xf32>
    tpu.vector_store %arg8[%c0_6, %c0_7], %8 {strides = array<i32>} : memref<12x64xf32, #tpu.memory_space<vmem>>, vector<12x64xf32>,
    %c0_8 = arith.constant 0 : index
    %c0_9 = arith.constant 0 : index
    %10 = vector.load %arg1[%c0_8, %c0_9] : memref<20x8xf32, #tpu.memory_space<vmem>>, vector<20x8xf32>
    %11 = arith.truncf %10 : vector<20x8xf32> to vector<20x8xbf16>
    %c0_10 = arith.constant 0 : index
    %c0_11 = arith.constant 0 : index
    %12 = vector.load %arg4[%c0_10, %c0_11] : memref<8x128xbf16, #tpu.memory_space<vmem>>, vector<8x128xbf16>
    %cst_12 = arith.constant dense<0.000000e+00> : vector<20x128xf32>
    %13 = tpu.matmul %11, %12, %cst_12 {dimension_numbers = #tpu.dot_dimension_numbers<[1], [0], [0], [1], [0, 0, 1, 1], [], []>} : vector<20x8xbf16>, vector<8x128xbf16>, vector<20x128xf32> -> vector<20x128xf32>
    %c0_13 = arith.constant 0 : index
    %c0_14 = arith.constant 0 : index
    %14 = vector.load %arg5[%c0_13, %c0_14] : memref<1x128xf32, #tpu.memory_space<vmem>>, vector<1x128xf32>
    %15 = vector.broadcast %14 : vector<1x128xf32> to vector<20x128xf32>
    %16 = arith.addf %13, %15 : vector<20x128xf32>
    %cst_15 = arith.constant 0.000000e+00 : f32
    %17 = vector.broadcast %cst_15 : f32 to vector<20x128xf32>
    %18 = arith.maximumf %16, %17 : vector<20x128xf32>
    %19 = arith.truncf %18 : vector<20x128xf32> to vector<20x128xbf16>
    %c0_16 = arith.constant 0 : index
    %c0_17 = arith.constant 0 : index
    %20 = vector.load %arg6[%c0_16, %c0_17] : memref<128x4096xbf16, #tpu.memory_space<vmem>>, vector<128x4096xbf16>
    %cst_18 = arith.constant dense<0.000000e+00> : vector<20x4096xf32>
    %21 = tpu.matmul %19, %20, %cst_18 {dimension_numbers = #tpu.dot_dimension_numbers<[1], [0], [0], [1], [0, 0, 1, 1], [], []>} : vector<20x128xbf16>, vector<128x4096xbf16>, vector<20x4096xf32> -> vector<20x4096xf32>
    %c0_19 = arith.constant 0 : index
    %c0_20 = arith.constant 0 : index
    %22 = vector.load %arg7[%c0_19, %c0_20] : memref<1x4096xf32, #tpu.memory_space<vmem>>, vector<1x4096xf32>
    %23 = vector.broadcast %22 : vector<1x4096xf32> to vector<20x4096xf32>
    %24 = arith.addf %21, %23 : vector<20x4096xf32>
    %25 = arith.truncf %24 : vector<20x4096xf32> to vector<20x4096xbf16>
    %c0_21 = arith.constant 0 : index
    %c0_22 = arith.constant 0 : index
    %26 = vector.load %arg9[%c0_21, %c0_22] : memref<20x4096xbf16, #tpu.memory_space<vmem>>, vector<20x4096xbf16>
    tpu.vector_store %arg9[%c0_21, %c0_22], %25 {strides = array<i32>} : memref<20x4096xbf16, #tpu.memory_space<vmem>>, vector<20x4096xbf16>,
    return
  }
}

</mosaic_0001>

<llo_original>
// kernel: tpu_custom_call.1
$region0: #{tpu_custom_call.1}
  #allocation0 [shape = 'u32[]', space=smem, size = 0x4, offset = 0x4, fixed_abs, tag = 'smem constant byte address 0x4 - core index']
  #allocation1 [shape = 'u32[144,128]{1,0:T(1,128)}', space=vmem, size = 0x12000, scoped, tag = 'internal scratch']
  %s0 = inlined_call_operand.vmem [shape: f32[12,16], index: 0, kind: input, shape index: {}]
  %s1 = inlined_call_operand.vmem [shape: f32[20,8], index: 1, kind: input, shape index: {}]
  %s2 = inlined_call_operand.vmem [shape: bf16[16,64], index: 2, kind: input, shape index: {}]
  %s3 = inlined_call_operand.vmem [shape: f32[1,64], index: 3, kind: input, shape index: {}]
  %s4 = inlined_call_operand.hbm [shape: bf16[8,128], index: 4, kind: input, shape index: {}]
  %s5 = inlined_call_operand.vmem [shape: f32[1,128], index: 5, kind: input, shape index: {}]
  %s6 = inlined_call_operand.hbm [shape: bf16[128,4096], index: 6, kind: input, shape index: {}]
  %s7 = inlined_call_operand.vmem [shape: f32[1,4096], index: 7, kind: input, shape index: {}]
  %s8 = inlined_call_operand.hbm [shape: f32[12,64], index: 8, kind: output, shape index: {0}]
  %s9 = inlined_call_operand.hbm [shape: bf16[20,4096], index: 9, kind: output, shape index: {1}]
  %10 = xla_tuple %s8, %s9
  %s11 = sld [smem:[#allocation0]]
  $region58: #{tpu_custom_call.1} parent=0
    _
  %s13 = ssub.s32 1, %s11
  %s14 = scalar_select 0, %s13, %s11
  $region1: #{tpu_custom_call.1} parent=0
    #allocation2 [shape = 'u8[2048]{0}', space=vmem, size = 0x800, scoped, tag = 'input window, operand 4, single buffered']
    #allocation3 [shape = 's32[1]{0}', space=sflag, size = 0x4, scoped, tag = 'scoped memory for tpu_custom_call.1']
    #allocation4 [shape = 's32[1]{0}', space=sflag, size = 0x4, scoped, tag = 'scoped memory for tpu_custom_call.1']
    #allocation5 [shape = 'u8[1048576]{0}', space=vmem, size = 0x100000, scoped, tag = 'input window, operand 6, single buffered']
    #allocation6 [shape = 's32[1]{0}', space=sflag, size = 0x4, scoped, tag = 'scoped memory for tpu_custom_call.1']
    #allocation7 [shape = 'u8[8192]{0}', space=vmem, size = 0x2000, scoped, tag = 'output window, operand 0, single buffered']
    #allocation8 [shape = 'u8[196608]{0}', space=vmem, size = 0x30000, scoped, tag = 'output window, operand 1, single buffered']
    #allocation9 [shape = 's32[1]{0}', space=sflag, size = 0x4, scoped, tag = 'scoped memory for tpu_custom_call.1']
    %15 = vsyncpa [#allocation3], 0
    %16 = vsyncpa [#allocation6], 0
    %17 = vsyncpa [#allocation4], 0
    %18 = vsyncpa [#allocation9], 0
    // Predicated region
    $region2: #{tpu_custom_call.1} parent=1 // pred_check
      _
    $region3: #{tpu_custom_call.1} parent=1 // pred_check_branch
      %20 = sbr.rel (0) target = $region5
    $region4: #{tpu_custom_call.1} parent=1 // pred_region
      _
    $region5: #{tpu_custom_call.1} parent=1 // pred_fallthru
      _
    // Predicated region
    $region6: #{tpu_custom_call.1} parent=1 // pred_check
      _
    $region7: #{tpu_custom_call.1} parent=1 // pred_check_branch
      %22 = sbr.rel (0) target = $region9
    $region8: #{tpu_custom_call.1} parent=1 // pred_region
      _
    $region9: #{tpu_custom_call.1} parent=1 // pred_fallthru
      _
    // Predicated region
    $region10: #{tpu_custom_call.1} parent=1 // pred_check
      _
    $region11: #{tpu_custom_call.1} parent=1 // pred_check_branch
      %24 = sbr.rel (0) target = $region13
    $region12: #{tpu_custom_call.1} parent=1 // pred_region
      _
    $region13: #{tpu_custom_call.1} parent=1 // pred_fallthru
      _
    // Predicated region
    $region14: #{tpu_custom_call.1} parent=1 // pred_check
      _
    $region15: #{tpu_custom_call.1} parent=1 // pred_check_branch
      %26 = sbr.rel (0) target = $region17
    $region16: #{tpu_custom_call.1} parent=1 // pred_region
      _
    $region17: #{tpu_custom_call.1} parent=1 // pred_fallthru
      _
    // Predicated region
    $region18: #{tpu_custom_call.1} parent=1 // pred_check
      _
    $region19: #{tpu_custom_call.1} parent=1 // pred_check_branch
      %28 = sbr.rel (0) target = $region21
    $region20: #{tpu_custom_call.1} parent=1 // pred_region
      %s30 = ssub.s32 64, 64
      %31 = vsyncadd [#allocation3], %s30
      %s33 = sshll.u32 [#allocation2], 4
      %s34 = int_to_ptr.vmem [resolvable:$true] %s33
      %36 = dma.hbm_to_vmem [thread:$0]  %s4, 64, %s34, [#allocation3]
    $region21: #{tpu_custom_call.1} parent=1 // pred_fallthru
      _
    // Predicated region
    $region22: #{tpu_custom_call.1} parent=1 // pred_check
      _
    $region23: #{tpu_custom_call.1} parent=1 // pred_check_branch
      %38 = sbr.rel (0) target = $region25
    $region24: #{tpu_custom_call.1} parent=1 // pred_region
      _
    $region25: #{tpu_custom_call.1} parent=1 // pred_fallthru
      _
    // Predicated region
    $region26: #{tpu_custom_call.1} parent=1 // pred_check
      _
    $region27: #{tpu_custom_call.1} parent=1 // pred_check_branch
      %40 = sbr.rel (0) target = $region29
    $region28: #{tpu_custom_call.1} parent=1 // pred_region
      %s42 = ssub.s32 32768, 32768
      %43 = vsyncadd [#allocation6], %s42
      %s44 = sshll.u32 [#allocation5], 4
      %s45 = int_to_ptr.vmem [resolvable:$true] %s44
      %50 = dma.hbm_to_vmem [thread:$0]  %s6, 32768, %s45, [#allocation6], 2048, 2048, 128
    $region29: #{tpu_custom_call.1} parent=1 // pred_fallthru
      _
    // Predicated region
    $region30: #{tpu_custom_call.1} parent=1 // pred_check
      _
    $region31: #{tpu_custom_call.1} parent=1 // pred_check_branch
      %52 = sbr.rel (0) target = $region33
    $region32: #{tpu_custom_call.1} parent=1 // pred_region
      _
    $region33: #{tpu_custom_call.1} parent=1 // pred_fallthru
      _
    // Predicated region
    $region34: #{tpu_custom_call.1} parent=1 // pred_check
      _
    $region35: #{tpu_custom_call.1} parent=1 // pred_check_branch
      %54 = sbr.rel (0) target = $region37
    $region36: #{tpu_custom_call.1} parent=1 // pred_region
      %55 = dma.done [#allocation3], 64
    $region37: #{tpu_custom_call.1} parent=1 // pred_fallthru
      _
    // Predicated region
    $region38: #{tpu_custom_call.1} parent=1 // pred_check
      _
    $region39: #{tpu_custom_call.1} parent=1 // pred_check_branch
      %57 = sbr.rel (0) target = $region41
    $region40: #{tpu_custom_call.1} parent=1 // pred_region
      %58 = dma.done [#allocation6], 32768
    $region41: #{tpu_custom_call.1} parent=1 // pred_fallthru
      _
    %v60 = vld [vmem:[%s0] sm:$0xff]
    %v61 = vld [vmem:[%s0 + $0x8] sm:$0xf]
    %v62 = vpack.c.bf16 %v61, %v60
    %v63 = vld [vmem:[%s2] sm:$0xf]
    %v64 = vld [vmem:[%s2 + $0x4] sm:$0xf]
    %v65 = vld [vmem:[%s3] sm:$0x1]
    %v67 = vlaneseq
    %v68 = vshrl.u32 %v67, 7
    %v69 = vsub.s32 0, %v68
    %v70 = vrot.slane %v65, %v69
    %v74 = vunpack.c.l.b16 %v63
    %v75 = vunpack.c.l.b16 %v64
    %v76 = vpack.c.b16 %v75, %v74
    %vm78 = vcmask 130048
    %v80 = vsel %vm78, %v62, 0
    %82 = vmatprep.subr.bf16.mxu0 0
    %83 = vmatpush1.bf16.msra.mxu0 %v76
    %84 = vmatprep.subr.bf16.mxu0 0
    %85 = vmatpush1.bf16.msra.mxu0 0
    %86 = vmatprep.subr.bf16.mxu0 0
    %87 = vmatpush1.bf16.msra.mxu0 0
    %88 = vmatprep.subr.bf16.mxu0 0
    %89 = vmatpush1.bf16.msra.mxu0 0
    %90 = vmatprep.subr.bf16.mxu0 0
    %91 = vmatpush1.bf16.msra.mxu0 0
    %92 = vmatprep.subr.bf16.mxu0 0
    %93 = vmatpush1.bf16.msra.mxu0 0
    %94 = vmatprep.subr.bf16.mxu0 0
    %95 = vmatpush1.bf16.msra.mxu0 0
    %96 = vmatprep.subr.bf16.mxu0 0
    %97 = vmatpush1.bf16.msra.mxu0 0
    %98 = vmatprep.subr.bf16.mxu0 0
    %99 = vmatpush1.bf16.msra.mxu0 0
    %100 = vmatprep.subr.bf16.mxu0 0
    %101 = vmatpush1.bf16.msra.mxu0 0
    %102 = vmatprep.subr.bf16.mxu0 0
    %103 = vmatpush1.bf16.msra.mxu0 0
    %104 = vmatprep.subr.bf16.mxu0 0
    %105 = vmatpush1.bf16.msra.mxu0 0
    %106 = vmatprep.subr.bf16.mxu0 0
    %107 = vmatpush1.bf16.msra.mxu0 0
    %108 = vmatprep.subr.bf16.mxu0 0
    %109 = vmatpush1.bf16.msra.mxu0 0
    %110 = vmatprep.subr.bf16.mxu0 0
    %111 = vmatpush1.bf16.msra.mxu0 0
    %112 = vmatprep.subr.bf16.mxu0 0
    %113 = vmatpush1.bf16.msra.mxu0 0
    %114 = vmatprep.mubr.bf16.mxu0 0
    %115 = vmatmul.mubr.bf16.gmra.mrb[0].mxu0 %v80
    %v116 = vpop.f32.mrb[0].mxu0
    %v117 = vadd.f32 %v70, %v116
    %v118 = vpop.f32.mrb[0].mxu0
    %v119 = vpop.f32.mrb[0].mxu0
    %v120 = vadd.f32 %v70, %v119
    %v121 = vpop.f32.mrb[0].mxu0
    %122 = vdwg.mxu0
    %v123 = vmax.f32 %v117, 0.0
    %v124 = vmax.f32 %v120, 0.0
    %vm125 = vcmask 523264
    %126 = vst.msk [vmem:[#allocation7] sm:$0xff] %vm125, %v123
    %vm127 = vcmask 519168
    %128 = vst.msk [vmem:[#allocation7 + $0x8] sm:$0xf] %vm127, %v124
    %v129 = vld [vmem:[%s1] sm:$0xff]
    %v130 = vld [vmem:[%s1 + $0x8] sm:$0xff]
    %v131 = vld [vmem:[%s1 + $0x10] sm:$0xf]
    %v132 = vpack.c.bf16 %v130, %v129
    %v133 = vpack.c.bf16 %v131, %v131
    %v134 = vld [vmem:[#allocation2] sm:$0xf]
    %v135 = vld [vmem:[%s5] sm:$0x1]
    %v137 = vlaneseq
    %v138 = vshrl.u32 %v137, 7
    %v139 = vsub.s32 0, %v138
    %v140 = vrot.slane %v135, %v139
    %vm142 = vcmask 64512
    %v144 = vsel %vm142, %v132, 0
    %v147 = vsel %vm142, %v133, 0
    %vm149 = vcmask 1043456
    %v151 = vsel %vm149, %v134, 0
    %153 = vmatprep.subr.bf16.mxu0 0
    %154 = vmatpush1.bf16.msra.mxu0 %v151
    %155 = vmatprep.subr.bf16.mxu0 0
    %156 = vmatpush1.bf16.msra.mxu0 0
    %157 = vmatprep.subr.bf16.mxu0 0
    %158 = vmatpush1.bf16.msra.mxu0 0
    %159 = vmatprep.subr.bf16.mxu0 0
    %160 = vmatpush1.bf16.msra.mxu0 0
    %161 = vmatprep.subr.bf16.mxu0 0
    %162 = vmatpush1.bf16.msra.mxu0 0
    %163 = vmatprep.subr.bf16.mxu0 0
    %164 = vmatpush1.bf16.msra.mxu0 0
    %165 = vmatprep.subr.bf16.mxu0 0
    %166 = vmatpush1.bf16.msra.mxu0 0
    %167 = vmatprep.subr.bf16.mxu0 0
    %168 = vmatpush1.bf16.msra.mxu0 0
    %169 = vmatprep.subr.bf16.mxu0 0
    %170 = vmatpush1.bf16.msra.mxu0 0
    %171 = vmatprep.subr.bf16.mxu0 0
    %172 = vmatpush1.bf16.msra.mxu0 0
    %173 = vmatprep.subr.bf16.mxu0 0
    %174 = vmatpush1.bf16.msra.mxu0 0
    %175 = vmatprep.subr.bf16.mxu0 0
    %176 = vmatpush1.bf16.msra.mxu0 0
    %177 = vmatprep.subr.bf16.mxu0 0
    %178 = vmatpush1.bf16.msra.mxu0 0
    %179 = vmatprep.subr.bf16.mxu0 0
    %180 = vmatpush1.bf16.msra.mxu0 0
    %181 = vmatprep.subr.bf16.mxu0 0
    %182 = vmatpush1.bf16.msra.mxu0 0
    %183 = vmatprep.subr.bf16.mxu0 0
    %184 = vmatpush1.bf16.msra.mxu0 0
    %185 = vmatprep.mubr.bf16.mxu0 0
    %186 = vmatmul.mubr.bf16.gmra.mrb[0].mxu0 %v144
    %v187 = vpop.f32.mrb[0].mxu0
    %v188 = vadd.f32 %v140, %v187
    %v189 = vpop.f32.mrb[0].mxu0
    %v190 = vpop.f32.mrb[0].mxu0
    %v191 = vadd.f32 %v140, %v190
    %v192 = vpop.f32.mrb[0].mxu0
    %193 = vmatprep.mubr.bf16.mxu0 0
    %194 = vmatmul.mubr.bf16.gmra.mrb[0].mxu0 %v147
    %v195 = vpop.f32.mrb[0].mxu0
    %v196 = vadd.f32 %v140, %v195
    %v197 = vpop.f32.mrb[0].mxu0
    %v198 = vpop.f32.mrb[0].mxu0
    %v199 = vpop.f32.mrb[0].mxu0
    %200 = vdwg.mxu0
    %v201 = vmax.f32 %v188, 0.0
    %v202 = vmax.f32 %v191, 0.0
    %v203 = vmax.f32 %v196, 0.0
    %v204 = vpack.c.bf16 %v202, %v201
    %v205 = vpack.c.bf16 %v203, %v203
    %v206 = vld [vmem:[#allocation5] sm:$0xff]
    %v207 = vld [vmem:[#allocation5 + $0x8] sm:$0xff]
    %v208 = vld [vmem:[#allocation5 + $0x10] sm:$0xff]
    %v209 = vld [vmem:[#allocation5 + $0x18] sm:$0xff]
    %v210 = vld [vmem:[#allocation5 + $0x20] sm:$0xff]
    %v211 = vld [vmem:[#allocation5 + $0x28] sm:$0xff]
    %v212 = vld [vmem:[#allocation5 + $0x30] sm:$0xff]
    %v213 = vld [vmem:[#allocation5 + $0x38] sm:$0xff]
    %v214 = vld [vmem:[#allocation5 + $0x40] sm:$0xff]
    %v215 = vld [vmem:[#allocation5 + $0x48] sm:$0xff]
    %v216 = vld [vmem:[#allocation5 + $0x50] sm:$0xff]
    %v217 = vld [vmem:[#allocation5 + $0x58] sm:$0xff]
    %v218 = vld [vmem:[#allocation5 + $0x60] sm:$0xff]
    %v219 = vld [vmem:[#allocation5 + $0x68] sm:$0xff]
    %v220 = vld [vmem:[#allocation5 + $0x70] sm:$0xff]
    %v221 = vld [vmem:[#allocation5 + $0x78] sm:$0xff]
    %v222 = vld [vmem:[#allocation5 + $0x80] sm:$0xff]
    %v223 = vld [vmem:[#allocation5 + $0x88] sm:$0xff]
    %v224 = vld [vmem:[#allocation5 + $0x90] sm:$0xff]
    %v225 = vld [vmem:[#allocation5 + $0x98] sm:$0xff]
    %v226 = vld [vmem:[#allocation5 + $0xa0] sm:$0xff]
    %v227 = vld [vmem:[#allocation5 + $0xa8] sm:$0xff]
    %v228 = vld [vmem:[#allocation5 + $0xb0] sm:$0xff]
    %v229 = vld [vmem:[#allocation5 + $0xb8] sm:$0xff]
    %v230 = vld [vmem:[#allocation5 + $0xc0] sm:$0xff]
    %v231 = vld [vmem:[#allocation5 + $0xc8] sm:$0xff]
    %v232 = vld [vmem:[#allocation5 + $0xd0] sm:$0xff]
    %v233 = vld [vmem:[#allocation5 + $0xd8] sm:$0xff]
    %v234 = vld [vmem:[#allocation5 + $0xe0] sm:$0xff]
    %v235 = vld [vmem:[#allocation5 + $0xe8] sm:$0xff]
    %v236 = vld [vmem:[#allocation5 + $0xf0] sm:$0xff]
    %v237 = vld [vmem:[#allocation5 + $0xf8] sm:$0xff]
    %v238 = vld [vmem:[#allocation5 + $0x100] sm:$0xff]
    %v239 = vld [vmem:[#allocation5 + $0x108] sm:$0xff]
    %v240 = vld [vmem:[#allocation5 + $0x110] sm:$0xff]
    %v241 = vld [vmem:[#allocation5 + $0x118] sm:$0xff]
    %v242 = vld [vmem:[#allocation5 + $0x120] sm:$0xff]
    %v243 = vld [vmem:[#allocation5 + $0x128] sm:$0xff]
    %v244 = vld [vmem:[#allocation5 + $0x130] sm:$0xff]
    %v245 = vld [vmem:[#allocation5 + $0x138] sm:$0xff]
    %v246 = vld [vmem:[#allocation5 + $0x140] sm:$0xff]
    %v247 = vld [vmem:[#allocation5 + $0x148] sm:$0xff]
    %v248 = vld [vmem:[#allocation5 + $0x150] sm:$0xff]
    %v249 = vld [vmem:[#allocation5 + $0x158] sm:$0xff]
    %v250 = vld [vmem:[#allocation5 + $0x160] sm:$0xff]
    %v251 = vld [vmem:[#allocation5 + $0x168] sm:$0xff]
    %v252 = vld [vmem:[#allocation5 + $0x170] sm:$0xff]
    %v253 = vld [vmem:[#allocation5 + $0x178] sm:$0xff]
    %v254 = vld [vmem:[#allocation5 + $0x180] sm:$0xff]
    %v255 = vld [vmem:[#allocation5 + $0x188] sm:$0xff]
    %v256 = vld [vmem:[#allocation5 + $0x190] sm:$0xff]
    %v257 = vld [vmem:[#allocation5 + $0x198] sm:$0xff]
    %v258 = vld [vmem:[#allocation5 + $0x1a0] sm:$0xff]
    %v259 = vld [vmem:[#allocation5 + $0x1a8] sm:$0xff]
    %v260 = vld [vmem:[#allocation5 + $0x1b0] sm:$0xff]
    %v261 = vld [vmem:[#allocation5 + $0x1b8] sm:$0xff]
    %v262 = vld [vmem:[#allocation5 + $0x1c0] sm:$0xff]
    %v263 = vld [vmem:[#allocation5 + $0x1c8] sm:$0xff]
    %v264 = vld [vmem:[#allocation5 + $0x1d0] sm:$0xff]
    %v265 = vld [vmem:[#allocation5 + $0x1d8] sm:$0xff]
    %v266 = vld [vmem:[#allocation5 + $0x1e0] sm:$0xff]
    %v267 = vld [vmem:[#allocation5 + $0x1e8] sm:$0xff]
    %v268 = vld [vmem:[#allocation5 + $0x1f0] sm:$0xff]
    %v269 = vld [vmem:[#allocation5 + $0x1f8] sm:$0xff]
    %v270 = vld [vmem:[#allocation5 + $0x200] sm:$0xff]
    %v271 = vld [vmem:[#allocation5 + $0x208] sm:$0xff]
    %v272 = vld [vmem:[#allocation5 + $0x210] sm:$0xff]
    %v273 = vld [vmem:[#allocation5 + $0x218] sm:$0xff]
    %v274 = vld [vmem:[#allocation5 + $0x220] sm:$0xff]
    %v275 = vld [vmem:[#allocation5 + $0x228] sm:$0xff]
    %v276 = vld [vmem:[#allocation5 + $0x230] sm:$0xff]
    %v277 = vld [vmem:[#allocation5 + $0x238] sm:$0xff]
    %v278 = vld [vmem:[#allocation5 + $0x240] sm:$0xff]
    %v279 = vld [vmem:[#allocation5 + $0x248] sm:$0xff]
    %v280 = vld [vmem:[#allocation5 + $0x250] sm:$0xff]
    %v281 = vld [vmem:[#allocation5 + $0x258] sm:$0xff]
    %v282 = vld [vmem:[#allocation5 + $0x260] sm:$0xff]
    %v283 = vld [vmem:[#allocation5 + $0x268] sm:$0xff]
    %v284 = vld [vmem:[#allocation5 + $0x270] sm:$0xff]
    %v285 = vld [vmem:[#allocation5 + $0x278] sm:$0xff]
    %v286 = vld [vmem:[#allocation5 + $0x280] sm:$0xff]
    %v287 = vld [vmem:[#allocation5 + $0x288] sm:$0xff]
    %v288 = vld [vmem:[#allocation5 + $0x290] sm:$0xff]
    %v289 = vld [vmem:[#allocation5 + $0x298] sm:$0xff]
    %v290 = vld [vmem:[#allocation5 + $0x2a0] sm:$0xff]
    %v291 = vld [vmem:[#allocation5 + $0x2a8] sm:$0xff]
    %v292 = vld [vmem:[#allocation5 + $0x2b0] sm:$0xff]
    %v293 = vld [vmem:[#allocation5 + $0x2b8] sm:$0xff]
    %v294 = vld [vmem:[#allocation5 + $0x2c0] sm:$0xff]
    %v295 = vld [vmem:[#allocation5 + $0x2c8] sm:$0xff]
    %v296 = vld [vmem:[#allocation5 + $0x2d0] sm:$0xff]
    %v297 = vld [vmem:[#allocation5 + $0x2d8] sm:$0xff]
    %v298 = vld [vmem:[#allocation5 + $0x2e0] sm:$0xff]
    %v299 = vld [vmem:[#allocation5 + $0x2e8] sm:$0xff]
    %v300 = vld [vmem:[#allocation5 + $0x2f0] sm:$0xff]
    %v301 = vld [vmem:[#allocation5 + $0x2f8] sm:$0xff]
    %v302 = vld [vmem:[#allocation5 + $0x300] sm:$0xff]
    %v303 = vld [vmem:[#allocation5 + $0x308] sm:$0xff]
    %v304 = vld [vmem:[#allocation5 + $0x310] sm:$0xff]
    %v305 = vld [vmem:[#allocation5 + $0x318] sm:$0xff]
    %v306 = vld [vmem:[#allocation5 + $0x320] sm:$0xff]
    %v307 = vld [vmem:[#allocation5 + $0x328] sm:$0xff]
    %v308 = vld [vmem:[#allocation5 + $0x330] sm:$0xff]
    %v309 = vld [vmem:[#allocation5 + $0x338] sm:$0xff]
    %v310 = vld [vmem:[#allocation5 + $0x340] sm:$0xff]
    %v311 = vld [vmem:[#allocation5 + $0x348] sm:$0xff]
    %v312 = vld [vmem:[#allocation5 + $0x350] sm:$0xff]
    %v313 = vld [vmem:[#allocation5 + $0x358] sm:$0xff]
    %v314 = vld [vmem:[#allocation5 + $0x360] sm:$0xff]
    %v315 = vld [vmem:[#allocation5 + $0x368] sm:$0xff]
    %v316 = vld [vmem:[#allocation5 + $0x370] sm:$0xff]
    %v317 = vld [vmem:[#allocation5 + $0x378] sm:$0xff]
    %v318 = vld [vmem:[#allocation5 + $0x380] sm:$0xff]
    %v319 = vld [vmem:[#allocation5 + $0x388] sm:$0xff]
    %v320 = vld [vmem:[#allocation5 + $0x390] sm:$0xff]
    %v321 = vld [vmem:[#allocation5 + $0x398] sm:$0xff]
    %v322 = vld [vmem:[#allocation5 + $0x3a0] sm:$0xff]
    %v323 = vld [vmem:[#allocation5 + $0x3a8] sm:$0xff]
    %v324 = vld [vmem:[#allocation5 + $0x3b0] sm:$0xff]
    %v325 = vld [vmem:[#allocation5 + $0x3b8] sm:$0xff]
    %v326 = vld [vmem:[#allocation5 + $0x3c0] sm:$0xff]
    %v327 = vld [vmem:[#allocation5 + $0x3c8] sm:$0xff]
    %v328 = vld [vmem:[#allocation5 + $0x3d0] sm:$0xff]
    %v329 = vld [vmem:[#allocation5 + $0x3d8] sm:$0xff]
    %v330 = vld [vmem:[#allocation5 + $0x3e0] sm:$0xff]
    %v331 = vld [vmem:[#allocation5 + $0x3e8] sm:$0xff]
    %v332 = vld [vmem:[#allocation5 + $0x3f0] sm:$0xff]
    %v333 = vld [vmem:[#allocation5 + $0x3f8] sm:$0xff]
    %v334 = vld [vmem:[#allocation5 + $0x400] sm:$0xff]
    %v335 = vld [vmem:[#allocation5 + $0x408] sm:$0xff]
    %v336 = vld [vmem:[#allocation5 + $0x410] sm:$0xff]
    %v337 = vld [vmem:[#allocation5 + $0x418] sm:$0xff]
    %v338 = vld [vmem:[#allocation5 + $0x420] sm:$0xff]
    %v339 = vld [vmem:[#allocation5 + $0x428] sm:$0xff]
    %v340 = vld [vmem:[#allocation5 + $0x430] sm:$0xff]
    %v341 = vld [vmem:[#allocation5 + $0x438] sm:$0xff]
    %v342 = vld [vmem:[#allocation5 + $0x440] sm:$0xff]
    %v343 = vld [vmem:[#allocation5 + $0x448] sm:$0xff]
    %v344 = vld [vmem:[#allocation5 + $0x450] sm:$0xff]
    %v345 = vld [vmem:[#allocation5 + $0x458] sm:$0xff]
    %v346 = vld [vmem:[#allocation5 + $0x460] sm:$0xff]
    %v347 = vld [vmem:[#allocation5 + $0x468] sm:$0xff]
    %v348 = vld [vmem:[#allocation5 + $0x470] sm:$0xff]
    %v349 = vld [vmem:[#allocation5 + $0x478] sm:$0xff]
    %v350 = vld [vmem:[#allocation5 + $0x480] sm:$0xff]
    %v351 = vld [vmem:[#allocation5 + $0x488] sm:$0xff]
    %v352 = vld [vmem:[#allocation5 + $0x490] sm:$0xff]
    %v353 = vld [vmem:[#allocation5 + $0x498] sm:$0xff]
    %v354 = vld [vmem:[#allocation5 + $0x4a0] sm:$0xff]
    %v355 = vld [vmem:[#allocation5 + $0x4a8] sm:$0xff]
    %v356 = vld [vmem:[#allocation5 + $0x4b0] sm:$0xff]
    %v357 = vld [vmem:[#allocation5 + $0x4b8] sm:$0xff]
    %v358 = vld [vmem:[#allocation5 + $0x4c0] sm:$0xff]
    %v359 = vld [vmem:[#allocation5 + $0x4c8] sm:$0xff]
    %v360 = vld [vmem:[#allocation5 + $0x4d0] sm:$0xff]
    %v361 = vld [vmem:[#allocation5 + $0x4d8] sm:$0xff]
    %v362 = vld [vmem:[#allocation5 + $0x4e0] sm:$0xff]
    %v363 = vld [vmem:[#allocation5 + $0x4e8] sm:$0xff]
    %v364 = vld [vmem:[#allocation5 + $0x4f0] sm:$0xff]
    %v365 = vld [vmem:[#allocation5 + $0x4f8] sm:$0xff]
    %v366 = vld [vmem:[#allocation5 + $0x500] sm:$0xff]
    %v367 = vld [vmem:[#allocation5 + $0x508] sm:$0xff]
    %v368 = vld [vmem:[#allocation5 + $0x510] sm:$0xff]
    %v369 = vld [vmem:[#allocation5 + $0x518] sm:$0xff]
    %v370 = vld [vmem:[#allocation5 + $0x520] sm:$0xff]
    %v371 = vld [vmem:[#allocation5 + $0x528] sm:$0xff]
    %v372 = vld [vmem:[#allocation5 + $0x530] sm:$0xff]
    %v373 = vld [vmem:[#allocation5 + $0x538] sm:$0xff]
    %v374 = vld [vmem:[#allocation5 + $0x540] sm:$0xff]
    %v375 = vld [vmem:[#allocation5 + $0x548] sm:$0xff]
    %v376 = vld [vmem:[#allocation5 + $0x550] sm:$0xff]
    %v377 = vld [vmem:[#allocation5 + $0x558] sm:$0xff]
    %v378 = vld [vmem:[#allocation5 + $0x560] sm:$0xff]
    %v379 = vld [vmem:[#allocation5 + $0x568] sm:$0xff]
    %v380 = vld [vmem:[#allocation5 + $0x570] sm:$0xff]
    %v381 = vld [vmem:[#allocation5 + $0x578] sm:$0xff]
    %v382 = vld [vmem:[#allocation5 + $0x580] sm:$0xff]
    %v383 = vld [vmem:[#allocation5 + $0x588] sm:$0xff]
    %v384 = vld [vmem:[#allocation5 + $0x590] sm:$0xff]
    %v385 = vld [vmem:[#allocation5 + $0x598] sm:$0xff]
    %v386 = vld [vmem:[#allocation5 + $0x5a0] sm:$0xff]
    %v387 = vld [vmem:[#allocation5 + $0x5a8] sm:$0xff]
    %v388 = vld [vmem:[#allocation5 + $0x5b0] sm:$0xff]
    %v389 = vld [vmem:[#allocation5 + $0x5b8] sm:$0xff]
    %v390 = vld [vmem:[#allocation5 + $0x5c0] sm:$0xff]
    %v391 = vld [vmem:[#allocation5 + $0x5c8] sm:$0xff]
    %v392 = vld [vmem:[#allocation5 + $0x5d0] sm:$0xff]
    %v393 = vld [vmem:[#allocation5 + $0x5d8] sm:$0xff]
    %v394 = vld [vmem:[#allocation5 + $0x5e0] sm:$0xff]
    %v395 = vld [vmem:[#allocation5 + $0x5e8] sm:$0xff]
    %v396 = vld [vmem:[#allocation5 + $0x5f0] sm:$0xff]
    %v397 = vld [vmem:[#allocation5 + $0x5f8] sm:$0xff]
    %v398 = vld [vmem:[#allocation5 + $0x600] sm:$0xff]
    %v399 = vld [vmem:[#allocation5 + $0x608] sm:$0xff]
    %v400 = vld [vmem:[#allocation5 + $0x610] sm:$0xff]
    %v401 = vld [vmem:[#allocation5 + $0x618] sm:$0xff]
    %v402 = vld [vmem:[#allocation5 + $0x620] sm:$0xff]
    %v403 = vld [vmem:[#allocation5 + $0x628] sm:$0xff]
    %v404 = vld [vmem:[#allocation5 + $0x630] sm:$0xff]
    %v405 = vld [vmem:[#allocation5 + $0x638] sm:$0xff]
    %v406 = vld [vmem:[#allocation5 + $0x640] sm:$0xff]
    %v407 = vld [vmem:[#allocation5 + $0x648] sm:$0xff]
    %v408 = vld [vmem:[#allocation5 + $0x650] sm:$0xff]
    %v409 = vld [vmem:[#allocation5 + $0x658] sm:$0xff]
    %v410 = vld [vmem:[#allocation5 + $0x660] sm:$0xff]
    %v411 = vld [vmem:[#allocation5 + $0x668] sm:$0xff]
    %v412 = vld [vmem:[#allocation5 + $0x670] sm:$0xff]
    %v413 = vld [vmem:[#allocation5 + $0x678] sm:$0xff]
    %v414 = vld [vmem:[#allocation5 + $0x680] sm:$0xff]
    %v415 = vld [vmem:[#allocation5 + $0x688] sm:$0xff]
    %v416 = vld [vmem:[#allocation5 + $0x690] sm:$0xff]
    %v417 = vld [vmem:[#allocation5 + $0x698] sm:$0xff]
    %v418 = vld [vmem:[#allocation5 + $0x6a0] sm:$0xff]
    %v419 = vld [vmem:[#allocation5 + $0x6a8] sm:$0xff]
    %v420 = vld [vmem:[#allocation5 + $0x6b0] sm:$0xff]
    %v421 = vld [vmem:[#allocation5 + $0x6b8] sm:$0xff]
    %v422 = vld [vmem:[#allocation5 + $0x6c0] sm:$0xff]
    %v423 = vld [vmem:[#allocation5 + $0x6c8] sm:$0xff]
    %v424 = vld [vmem:[#allocation5 + $0x6d0] sm:$0xff]
    %v425 = vld [vmem:[#allocation5 + $0x6d8] sm:$0xff]
    %v426 = vld [vmem:[#allocation5 + $0x6e0] sm:$0xff]
    %v427 = vld [vmem:[#allocation5 + $0x6e8] sm:$0xff]
    %v428 = vld [vmem:[#allocation5 + $0x6f0] sm:$0xff]
    %v429 = vld [vmem:[#allocation5 + $0x6f8] sm:$0xff]
    %v430 = vld [vmem:[#allocation5 + $0x700] sm:$0xff]
    %v431 = vld [vmem:[#allocation5 + $0x708] sm:$0xff]
    %v432 = vld [vmem:[#allocation5 + $0x710] sm:$0xff]
    %v433 = vld [vmem:[#allocation5 + $0x718] sm:$0xff]
    %v434 = vld [vmem:[#allocation5 + $0x720] sm:$0xff]
    %v435 = vld [vmem:[#allocation5 + $0x728] sm:$0xff]
    %v436 = vld [vmem:[#allocation5 + $0x730] sm:$0xff]
    %v437 = vld [vmem:[#allocation5 + $0x738] sm:$0xff]
    %v438 = vld [vmem:[#allocation5 + $0x740] sm:$0xff]
    %v439 = vld [vmem:[#allocation5 + $0x748] sm:$0xff]
    %v440 = vld [vmem:[#allocation5 + $0x750] sm:$0xff]
    %v441 = vld [vmem:[#allocation5 + $0x758] sm:$0xff]
    %v442 = vld [vmem:[#allocation5 + $0x760] sm:$0xff]
    %v443 = vld [vmem:[#allocation5 + $0x768] sm:$0xff]
    %v444 = vld [vmem:[#allocation5 + $0x770] sm:$0xff]
    %v445 = vld [vmem:[#allocation5 + $0x778] sm:$0xff]
    %v446 = vld [vmem:[#allocation5 + $0x780] sm:$0xff]
    %v447 = vld [vmem:[#allocation5 + $0x788] sm:$0xff]
    %v448 = vld [vmem:[#allocation5 + $0x790] sm:$0xff]
    %v449 = vld [vmem:[#allocation5 + $0x798] sm:$0xff]
    %v450 = vld [vmem:[#allocation5 + $0x7a0] sm:$0xff]
    %v451 = vld [vmem:[#allocation5 + $0x7a8] sm:$0xff]
    %v452 = vld [vmem:[#allocation5 + $0x7b0] sm:$0xff]
    %v453 = vld [vmem:[#allocation5 + $0x7b8] sm:$0xff]
    %v454 = vld [vmem:[#allocation5 + $0x7c0] sm:$0xff]
    %v455 = vld [vmem:[#allocation5 + $0x7c8] sm:$0xff]
    %v456 = vld [vmem:[#allocation5 + $0x7d0] sm:$0xff]
    %v457 = vld [vmem:[#allocation5 + $0x7d8] sm:$0xff]
    %v458 = vld [vmem:[#allocation5 + $0x7e0] sm:$0xff]
    %v459 = vld [vmem:[#allocation5 + $0x7e8] sm:$0xff]
    %v460 = vld [vmem:[#allocation5 + $0x7f0] sm:$0xff]
    %v461 = vld [vmem:[#allocation5 + $0x7f8] sm:$0xff]
    %v462 = vld [vmem:[%s7] sm:$0xff]
    %v463 = vld [vmem:[%s7 + $0x8] sm:$0xff]
    %v464 = vld [vmem:[%s7 + $0x10] sm:$0xff]
    %v465 = vld [vmem:[%s7 + $0x18] sm:$0xff]
    %v470 = vlaneseq
    %v471 = vshrl.u32 %v470, 7
    %v472 = vsub.s32 0, %v471
    %v473 = vrot.slane %v462, %v472
    %v474 = vlaneseq
    %v475 = vshrl.u32 %v474, 7
    %v476 = vsub.s32 1, %v475
    %v477 = vrot.slane %v462, %v476
    %v478 = vlaneseq
    %v479 = vshrl.u32 %v478, 7
    %v480 = vsub.s32 2, %v479
    %v481 = vrot.slane %v462, %v480
    %v482 = vlaneseq
    %v483 = vshrl.u32 %v482, 7
    %v484 = vsub.s32 3, %v483
    %v485 = vrot.slane %v462, %v484
    %v486 = vlaneseq
    %v487 = vshrl.u32 %v486, 7
    %v488 = vsub.s32 4, %v487
    %v489 = vrot.slane %v462, %v488
    %v490 = vlaneseq
    %v491 = vshrl.u32 %v490, 7
    %v492 = vsub.s32 5, %v491
    %v493 = vrot.slane %v462, %v492
    %v494 = vlaneseq
    %v495 = vshrl.u32 %v494, 7
    %v496 = vsub.s32 6, %v495
    %v497 = vrot.slane %v462, %v496
    %v498 = vlaneseq
    %v499 = vshrl.u32 %v498, 7
    %v500 = vsub.s32 7, %v499
    %v501 = vrot.slane %v462, %v500
    %v502 = vlaneseq
    %v503 = vshrl.u32 %v502, 7
    %v504 = vsub.s32 0, %v503
    %v505 = vrot.slane %v463, %v504
    %v506 = vlaneseq
    %v507 = vshrl.u32 %v506, 7
    %v508 = vsub.s32 1, %v507
    %v509 = vrot.slane %v463, %v508
    %v510 = vlaneseq
    %v511 = vshrl.u32 %v510, 7
    %v512 = vsub.s32 2, %v511
    %v513 = vrot.slane %v463, %v512
    %v514 = vlaneseq
    %v515 = vshrl.u32 %v514, 7
    %v516 = vsub.s32 3, %v515
    %v517 = vrot.slane %v463, %v516
    %v518 = vlaneseq
    %v519 = vshrl.u32 %v518, 7
    %v520 = vsub.s32 4, %v519
    %v521 = vrot.slane %v463, %v520
    %v522 = vlaneseq
    %v523 = vshrl.u32 %v522, 7
    %v524 = vsub.s32 5, %v523
    %v525 = vrot.slane %v463, %v524
    %v526 = vlaneseq
    %v527 = vshrl.u32 %v526, 7
    %v528 = vsub.s32 6, %v527
    %v529 = vrot.slane %v463, %v528
    %v530 = vlaneseq
    %v531 = vshrl.u32 %v530, 7
    %v532 = vsub.s32 7, %v531
    %v533 = vrot.slane %v463, %v532
    %v534 = vlaneseq
    %v535 = vshrl.u32 %v534, 7
    %v536 = vsub.s32 0, %v535
    %v537 = vrot.slane %v464, %v536
    %v538 = vlaneseq
    %v539 = vshrl.u32 %v538, 7
    %v540 = vsub.s32 1, %v539
    %v541 = vrot.slane %v464, %v540
    %v542 = vlaneseq
    %v543 = vshrl.u32 %v542, 7
    %v544 = vsub.s32 2, %v543
    %v545 = vrot.slane %v464, %v544
    %v546 = vlaneseq
    %v547 = vshrl.u32 %v546, 7
    %v548 = vsub.s32 3, %v547
    %v549 = vrot.slane %v464, %v548
    %v550 = vlaneseq
    %v551 = vshrl.u32 %v550, 7
    %v552 = vsub.s32 4, %v551
    %v553 = vrot.slane %v464, %v552
    %v554 = vlaneseq
    %v555 = vshrl.u32 %v554, 7
    %v556 = vsub.s32 5, %v555
    %v557 = vrot.slane %v464, %v556
    %v558 = vlaneseq
    %v559 = vshrl.u32 %v558, 7
    %v560 = vsub.s32 6, %v559
    %v561 = vrot.slane %v464, %v560
    %v562 = vlaneseq
    %v563 = vshrl.u32 %v562, 7
    %v564 = vsub.s32 7, %v563
    %v565 = vrot.slane %v464, %v564
    %v566 = vlaneseq
    %v567 = vshrl.u32 %v566, 7
    %v568 = vsub.s32 0, %v567
    %v569 = vrot.slane %v465, %v568
    %v570 = vlaneseq
    %v571 = vshrl.u32 %v570, 7
    %v572 = vsub.s32 1, %v571
    %v573 = vrot.slane %v465, %v572
    %v574 = vlaneseq
    %v575 = vshrl.u32 %v574, 7
    %v576 = vsub.s32 2, %v575
    %v577 = vrot.slane %v465, %v576
    %v578 = vlaneseq
    %v579 = vshrl.u32 %v578, 7
    %v580 = vsub.s32 3, %v579
    %v581 = vrot.slane %v465, %v580
    %v582 = vlaneseq
    %v583 = vshrl.u32 %v582, 7
    %v584 = vsub.s32 4, %v583
    %v585 = vrot.slane %v465, %v584
    %v586 = vlaneseq
    %v587 = vshrl.u32 %v586, 7
    %v588 = vsub.s32 5, %v587
    %v589 = vrot.slane %v465, %v588
    %v590 = vlaneseq
    %v591 = vshrl.u32 %v590, 7
    %v592 = vsub.s32 6, %v591
    %v593 = vrot.slane %v465, %v592
    %v594 = vlaneseq
    %v595 = vshrl.u32 %v594, 7
    %v596 = vsub.s32 7, %v595
    %v597 = vrot.slane %v465, %v596
    %v886 = vunpack.c.l.b16 %v206
    %v887 = vunpack.c.h.b16 %v206
    %v888 = vunpack.c.l.b16 %v207
    %v889 = vunpack.c.h.b16 %v207
    %v890 = vunpack.c.l.b16 %v208
    %v891 = vunpack.c.h.b16 %v208
    %v892 = vunpack.c.l.b16 %v209
    %v893 = vunpack.c.h.b16 %v209
    %v894 = vunpack.c.l.b16 %v210
    %v895 = vunpack.c.h.b16 %v210
    %v896 = vunpack.c.l.b16 %v211
    %v897 = vunpack.c.h.b16 %v211
    %v898 = vunpack.c.l.b16 %v212
    %v899 = vunpack.c.h.b16 %v212
    %v900 = vunpack.c.l.b16 %v213
    %v901 = vunpack.c.h.b16 %v213
    %v902 = vunpack.c.l.b16 %v214
    %v903 = vunpack.c.h.b16 %v214
    %v904 = vunpack.c.l.b16 %v215
    %v905 = vunpack.c.h.b16 %v215
    %v906 = vunpack.c.l.b16 %v216
    %v907 = vunpack.c.h.b16 %v216
    %v908 = vunpack.c.l.b16 %v217
    %v909 = vunpack.c.h.b16 %v217
    %v910 = vunpack.c.l.b16 %v218
    %v911 = vunpack.c.h.b16 %v218
    %v912 = vunpack.c.l.b16 %v219
    %v913 = vunpack.c.h.b16 %v219
    %v914 = vunpack.c.l.b16 %v220
    %v915 = vunpack.c.h.b16 %v220
    %v916 = vunpack.c.l.b16 %v221
    %v917 = vunpack.c.h.b16 %v221
    %v918 = vunpack.c.l.b16 %v222
    %v919 = vunpack.c.h.b16 %v222
    %v920 = vunpack.c.l.b16 %v223
    %v921 = vunpack.c.h.b16 %v223
    %v922 = vunpack.c.l.b16 %v224
    %v923 = vunpack.c.h.b16 %v224
    %v924 = vunpack.c.l.b16 %v225
    %v925 = vunpack.c.h.b16 %v225
    %v926 = vunpack.c.l.b16 %v226
    %v927 = vunpack.c.h.b16 %v226
    %v928 = vunpack.c.l.b16 %v227
    %v929 = vunpack.c.h.b16 %v227
    %v930 = vunpack.c.l.b16 %v228
    %v931 = vunpack.c.h.b16 %v228
    %v932 = vunpack.c.l.b16 %v229
    %v933 = vunpack.c.h.b16 %v229
    %v934 = vunpack.c.l.b16 %v230
    %v935 = vunpack.c.h.b16 %v230
    %v936 = vunpack.c.l.b16 %v231
    %v937 = vunpack.c.h.b16 %v231
    %v938 = vunpack.c.l.b16 %v232
    %v939 = vunpack.c.h.b16 %v232
    %v940 = vunpack.c.l.b16 %v233
    %v941 = vunpack.c.h.b16 %v233
    %v942 = vunpack.c.l.b16 %v234
    %v943 = vunpack.c.h.b16 %v234
    %v944 = vunpack.c.l.b16 %v235
    %v945 = vunpack.c.h.b16 %v235
    %v946 = vunpack.c.l.b16 %v236
    %v947 = vunpack.c.h.b16 %v236
    %v948 = vunpack.c.l.b16 %v237
    %v949 = vunpack.c.h.b16 %v237
    %v950 = vunpack.c.l.b16 %v238
    %v951 = vunpack.c.h.b16 %v238
    %v952 = vunpack.c.l.b16 %v239
    %v953 = vunpack.c.h.b16 %v239
    %v954 = vunpack.c.l.b16 %v240
    %v955 = vunpack.c.h.b16 %v240
    %v956 = vunpack.c.l.b16 %v241
    %v957 = vunpack.c.h.b16 %v241
    %v958 = vunpack.c.l.b16 %v242
    %v959 = vunpack.c.h.b16 %v242
    %v960 = vunpack.c.l.b16 %v243
    %v961 = vunpack.c.h.b16 %v243
    %v962 = vunpack.c.l.b16 %v244
    %v963 = vunpack.c.h.b16 %v244
    %v964 = vunpack.c.l.b16 %v245
    %v965 = vunpack.c.h.b16 %v245
    %v966 = vunpack.c.l.b16 %v246
    %v967 = vunpack.c.h.b16 %v246
    %v968 = vunpack.c.l.b16 %v247
    %v969 = vunpack.c.h.b16 %v247
    %v970 = vunpack.c.l.b16 %v248
    %v971 = vunpack.c.h.b16 %v248
    %v972 = vunpack.c.l.b16 %v249
    %v973 = vunpack.c.h.b16 %v249
    %v974 = vunpack.c.l.b16 %v250
    %v975 = vunpack.c.h.b16 %v250
    %v976 = vunpack.c.l.b16 %v251
    %v977 = vunpack.c.h.b16 %v251
    %v978 = vunpack.c.l.b16 %v252
    %v979 = vunpack.c.h.b16 %v252
    %v980 = vunpack.c.l.b16 %v253
    %v981 = vunpack.c.h.b16 %v253
    %v982 = vunpack.c.l.b16 %v254
    %v983 = vunpack.c.h.b16 %v254
    %v984 = vunpack.c.l.b16 %v255
    %v985 = vunpack.c.h.b16 %v255
    %v986 = vunpack.c.l.b16 %v256
    %v987 = vunpack.c.h.b16 %v256
    %v988 = vunpack.c.l.b16 %v257
    %v989 = vunpack.c.h.b16 %v257
    %v990 = vunpack.c.l.b16 %v258
    %v991 = vunpack.c.h.b16 %v258
    %v992 = vunpack.c.l.b16 %v259
    %v993 = vunpack.c.h.b16 %v259
    %v994 = vunpack.c.l.b16 %v260
    %v995 = vunpack.c.h.b16 %v260
    %v996 = vunpack.c.l.b16 %v261
    %v997 = vunpack.c.h.b16 %v261
    %v998 = vunpack.c.l.b16 %v262
    %v999 = vunpack.c.h.b16 %v262
    %v1000 = vunpack.c.l.b16 %v263
    %v1001 = vunpack.c.h.b16 %v263
    %v1002 = vunpack.c.l.b16 %v264
    %v1003 = vunpack.c.h.b16 %v264
    %v1004 = vunpack.c.l.b16 %v265
    %v1005 = vunpack.c.h.b16 %v265
    %v1006 = vunpack.c.l.b16 %v266
    %v1007 = vunpack.c.h.b16 %v266
    %v1008 = vunpack.c.l.b16 %v267
    %v1009 = vunpack.c.h.b16 %v267
    %v1010 = vunpack.c.l.b16 %v268
    %v1011 = vunpack.c.h.b16 %v268
    %v1012 = vunpack.c.l.b16 %v269
    %v1013 = vunpack.c.h.b16 %v269
    %v1014 = vunpack.c.l.b16 %v270
    %v1015 = vunpack.c.h.b16 %v270
    %v1016 = vunpack.c.l.b16 %v271
    %v1017 = vunpack.c.h.b16 %v271
    %v1018 = vunpack.c.l.b16 %v272
    %v1019 = vunpack.c.h.b16 %v272
    %v1020 = vunpack.c.l.b16 %v273
    %v1021 = vunpack.c.h.b16 %v273
    %v1022 = vunpack.c.l.b16 %v274
    %v1023 = vunpack.c.h.b16 %v274
    %v1024 = vunpack.c.l.b16 %v275
    %v1025 = vunpack.c.h.b16 %v275
    %v1026 = vunpack.c.l.b16 %v276
    %v1027 = vunpack.c.h.b16 %v276
    %v1028 = vunpack.c.l.b16 %v277
    %v1029 = vunpack.c.h.b16 %v277
    %v1030 = vunpack.c.l.b16 %v278
    %v1031 = vunpack.c.h.b16 %v278
    %v1032 = vunpack.c.l.b16 %v279
    %v1033 = vunpack.c.h.b16 %v279
    %v1034 = vunpack.c.l.b16 %v280
    %v1035 = vunpack.c.h.b16 %v280
    %v1036 = vunpack.c.l.b16 %v281
    %v1037 = vunpack.c.h.b16 %v281
    %v1038 = vunpack.c.l.b16 %v282
    %v1039 = vunpack.c.h.b16 %v282
    %v1040 = vunpack.c.l.b16 %v283
    %v1041 = vunpack.c.h.b16 %v283
    %v1042 = vunpack.c.l.b16 %v284
    %v1043 = vunpack.c.h.b16 %v284
    %v1044 = vunpack.c.l.b16 %v285
    %v1045 = vunpack.c.h.b16 %v285
    %v1046 = vunpack.c.l.b16 %v286
    %v1047 = vunpack.c.h.b16 %v286
    %v1048 = vunpack.c.l.b16 %v287
    %v1049 = vunpack.c.h.b16 %v287
    %v1050 = vunpack.c.l.b16 %v288
    %v1051 = vunpack.c.h.b16 %v288
    %v1052 = vunpack.c.l.b16 %v289
    %v1053 = vunpack.c.h.b16 %v289
    %v1054 = vunpack.c.l.b16 %v290
    %v1055 = vunpack.c.h.b16 %v290
    %v1056 = vunpack.c.l.b16 %v291
    %v1057 = vunpack.c.h.b16 %v291
    %v1058 = vunpack.c.l.b16 %v292
    %v1059 = vunpack.c.h.b16 %v292
    %v1060 = vunpack.c.l.b16 %v293
    %v1061 = vunpack.c.h.b16 %v293
    %v1062 = vunpack.c.l.b16 %v294
    %v1063 = vunpack.c.h.b16 %v294
    %v1064 = vunpack.c.l.b16 %v295
    %v1065 = vunpack.c.h.b16 %v295
    %v1066 = vunpack.c.l.b16 %v296
    %v1067 = vunpack.c.h.b16 %v296
    %v1068 = vunpack.c.l.b16 %v297
    %v1069 = vunpack.c.h.b16 %v297
    %v1070 = vunpack.c.l.b16 %v298
    %v1071 = vunpack.c.h.b16 %v298
    %v1072 = vunpack.c.l.b16 %v299
    %v1073 = vunpack.c.h.b16 %v299
    %v1074 = vunpack.c.l.b16 %v300
    %v1075 = vunpack.c.h.b16 %v300
    %v1076 = vunpack.c.l.b16 %v301
    %v1077 = vunpack.c.h.b16 %v301
    %v1078 = vunpack.c.l.b16 %v302
    %v1079 = vunpack.c.h.b16 %v302
    %v1080 = vunpack.c.l.b16 %v303
    %v1081 = vunpack.c.h.b16 %v303
    %v1082 = vunpack.c.l.b16 %v304
    %v1083 = vunpack.c.h.b16 %v304
    %v1084 = vunpack.c.l.b16 %v305
    %v1085 = vunpack.c.h.b16 %v305
    %v1086 = vunpack.c.l.b16 %v306
    %v1087 = vunpack.c.h.b16 %v306
    %v1088 = vunpack.c.l.b16 %v307
    %v1089 = vunpack.c.h.b16 %v307
    %v1090 = vunpack.c.l.b16 %v308
    %v1091 = vunpack.c.h.b16 %v308
    %v1092 = vunpack.c.l.b16 %v309
    %v1093 = vunpack.c.h.b16 %v309
    %v1094 = vunpack.c.l.b16 %v310
    %v1095 = vunpack.c.h.b16 %v310
    %v1096 = vunpack.c.l.b16 %v311
    %v1097 = vunpack.c.h.b16 %v311
    %v1098 = vunpack.c.l.b16 %v312
    %v1099 = vunpack.c.h.b16 %v312
    %v1100 = vunpack.c.l.b16 %v313
    %v1101 = vunpack.c.h.b16 %v313
    %v1102 = vunpack.c.l.b16 %v314
    %v1103 = vunpack.c.h.b16 %v314
    %v1104 = vunpack.c.l.b16 %v315
    %v1105 = vunpack.c.h.b16 %v315
    %v1106 = vunpack.c.l.b16 %v316
    %v1107 = vunpack.c.h.b16 %v316
    %v1108 = vunpack.c.l.b16 %v317
    %v1109 = vunpack.c.h.b16 %v317
    %v1110 = vunpack.c.l.b16 %v318
    %v1111 = vunpack.c.h.b16 %v318
    %v1112 = vunpack.c.l.b16 %v319
    %v1113 = vunpack.c.h.b16 %v319
    %v1114 = vunpack.c.l.b16 %v320
    %v1115 = vunpack.c.h.b16 %v320
    %v1116 = vunpack.c.l.b16 %v321
    %v1117 = vunpack.c.h.b16 %v321
    %v1118 = vunpack.c.l.b16 %v322
    %v1119 = vunpack.c.h.b16 %v322
    %v1120 = vunpack.c.l.b16 %v323
    %v1121 = vunpack.c.h.b16 %v323
    %v1122 = vunpack.c.l.b16 %v324
    %v1123 = vunpack.c.h.b16 %v324
    %v1124 = vunpack.c.l.b16 %v325
    %v1125 = vunpack.c.h.b16 %v325
    %v1126 = vunpack.c.l.b16 %v326
    %v1127 = vunpack.c.h.b16 %v326
    %v1128 = vunpack.c.l.b16 %v327
    %v1129 = vunpack.c.h.b16 %v327
    %v1130 = vunpack.c.l.b16 %v328
    %v1131 = vunpack.c.h.b16 %v328
    %v1132 = vunpack.c.l.b16 %v329
    %v1133 = vunpack.c.h.b16 %v329
    %v1134 = vunpack.c.l.b16 %v330
    %v1135 = vunpack.c.h.b16 %v330
    %v1136 = vunpack.c.l.b16 %v331
    %v1137 = vunpack.c.h.b16 %v331
    %v1138 = vunpack.c.l.b16 %v332
    %v1139 = vunpack.c.h.b16 %v332
    %v1140 = vunpack.c.l.b16 %v333
    %v1141 = vunpack.c.h.b16 %v333
    %v1142 = vunpack.c.l.b16 %v334
    %v1143 = vunpack.c.h.b16 %v334
    %v1144 = vunpack.c.l.b16 %v335
    %v1145 = vunpack.c.h.b16 %v335
    %v1146 = vunpack.c.l.b16 %v336
    %v1147 = vunpack.c.h.b16 %v336
    %v1148 = vunpack.c.l.b16 %v337
    %v1149 = vunpack.c.h.b16 %v337
    %v1150 = vunpack.c.l.b16 %v338
    %v1151 = vunpack.c.h.b16 %v338
    %v1152 = vunpack.c.l.b16 %v339
    %v1153 = vunpack.c.h.b16 %v339
    %v1154 = vunpack.c.l.b16 %v340
    %v1155 = vunpack.c.h.b16 %v340
    %v1156 = vunpack.c.l.b16 %v341
    %v1157 = vunpack.c.h.b16 %v341
    %v1158 = vunpack.c.l.b16 %v342
    %v1159 = vunpack.c.h.b16 %v342
    %v1160 = vunpack.c.l.b16 %v343
    %v1161 = vunpack.c.h.b16 %v343
    %v1162 = vunpack.c.l.b16 %v344
    %v1163 = vunpack.c.h.b16 %v344
    %v1164 = vunpack.c.l.b16 %v345
    %v1165 = vunpack.c.h.b16 %v345
    %v1166 = vunpack.c.l.b16 %v346
    %v1167 = vunpack.c.h.b16 %v346
    %v1168 = vunpack.c.l.b16 %v347
    %v1169 = vunpack.c.h.b16 %v347
    %v1170 = vunpack.c.l.b16 %v348
    %v1171 = vunpack.c.h.b16 %v348
    %v1172 = vunpack.c.l.b16 %v349
    %v1173 = vunpack.c.h.b16 %v349
    %v1174 = vunpack.c.l.b16 %v350
    %v1175 = vunpack.c.h.b16 %v350
    %v1176 = vunpack.c.l.b16 %v351
    %v1177 = vunpack.c.h.b16 %v351
    %v1178 = vunpack.c.l.b16 %v352
    %v1179 = vunpack.c.h.b16 %v352
    %v1180 = vunpack.c.l.b16 %v353
    %v1181 = vunpack.c.h.b16 %v353
    %v1182 = vunpack.c.l.b16 %v354
    %v1183 = vunpack.c.h.b16 %v354
    %v1184 = vunpack.c.l.b16 %v355
    %v1185 = vunpack.c.h.b16 %v355
    %v1186 = vunpack.c.l.b16 %v356
    %v1187 = vunpack.c.h.b16 %v356
    %v1188 = vunpack.c.l.b16 %v357
    %v1189 = vunpack.c.h.b16 %v357
    %v1190 = vunpack.c.l.b16 %v358
    %v1191 = vunpack.c.h.b16 %v358
    %v1192 = vunpack.c.l.b16 %v359
    %v1193 = vunpack.c.h.b16 %v359
    %v1194 = vunpack.c.l.b16 %v360
    %v1195 = vunpack.c.h.b16 %v360
    %v1196 = vunpack.c.l.b16 %v361
    %v1197 = vunpack.c.h.b16 %v361
    %v1198 = vunpack.c.l.b16 %v362
    %v1199 = vunpack.c.h.b16 %v362
    %v1200 = vunpack.c.l.b16 %v363
    %v1201 = vunpack.c.h.b16 %v363
    %v1202 = vunpack.c.l.b16 %v364
    %v1203 = vunpack.c.h.b16 %v364
    %v1204 = vunpack.c.l.b16 %v365
    %v1205 = vunpack.c.h.b16 %v365
    %v1206 = vunpack.c.l.b16 %v366
    %v1207 = vunpack.c.h.b16 %v366
    %v1208 = vunpack.c.l.b16 %v367
    %v1209 = vunpack.c.h.b16 %v367
    %v1210 = vunpack.c.l.b16 %v368
    %v1211 = vunpack.c.h.b16 %v368
    %v1212 = vunpack.c.l.b16 %v369
    %v1213 = vunpack.c.h.b16 %v369
    %v1214 = vunpack.c.l.b16 %v370
    %v1215 = vunpack.c.h.b16 %v370
    %v1216 = vunpack.c.l.b16 %v371
    %v1217 = vunpack.c.h.b16 %v371
    %v1218 = vunpack.c.l.b16 %v372
    %v1219 = vunpack.c.h.b16 %v372
    %v1220 = vunpack.c.l.b16 %v373
    %v1221 = vunpack.c.h.b16 %v373
    %v1222 = vunpack.c.l.b16 %v374
    %v1223 = vunpack.c.h.b16 %v374
    %v1224 = vunpack.c.l.b16 %v375
    %v1225 = vunpack.c.h.b16 %v375
    %v1226 = vunpack.c.l.b16 %v376
    %v1227 = vunpack.c.h.b16 %v376
    %v1228 = vunpack.c.l.b16 %v377
    %v1229 = vunpack.c.h.b16 %v377
    %v1230 = vunpack.c.l.b16 %v378
    %v1231 = vunpack.c.h.b16 %v378
    %v1232 = vunpack.c.l.b16 %v379
    %v1233 = vunpack.c.h.b16 %v379
    %v1234 = vunpack.c.l.b16 %v380
    %v1235 = vunpack.c.h.b16 %v380
    %v1236 = vunpack.c.l.b16 %v381
    %v1237 = vunpack.c.h.b16 %v381
    %v1238 = vunpack.c.l.b16 %v382
    %v1239 = vunpack.c.h.b16 %v382
    %v1240 = vunpack.c.l.b16 %v383
    %v1241 = vunpack.c.h.b16 %v383
    %v1242 = vunpack.c.l.b16 %v384
    %v1243 = vunpack.c.h.b16 %v384
    %v1244 = vunpack.c.l.b16 %v385
    %v1245 = vunpack.c.h.b16 %v385
    %v1246 = vunpack.c.l.b16 %v386
    %v1247 = vunpack.c.h.b16 %v386
    %v1248 = vunpack.c.l.b16 %v387
    %v1249 = vunpack.c.h.b16 %v387
    %v1250 = vunpack.c.l.b16 %v388
    %v1251 = vunpack.c.h.b16 %v388
    %v1252 = vunpack.c.l.b16 %v389
    %v1253 = vunpack.c.h.b16 %v389
    %v1254 = vunpack.c.l.b16 %v390
    %v1255 = vunpack.c.h.b16 %v390
    %v1256 = vunpack.c.l.b16 %v391
    %v1257 = vunpack.c.h.b16 %v391
    %v1258 = vunpack.c.l.b16 %v392
    %v1259 = vunpack.c.h.b16 %v392
    %v1260 = vunpack.c.l.b16 %v393
    %v1261 = vunpack.c.h.b16 %v393
    %v1262 = vunpack.c.l.b16 %v394
    %v1263 = vunpack.c.h.b16 %v394
    %v1264 = vunpack.c.l.b16 %v395
    %v1265 = vunpack.c.h.b16 %v395
    %v1266 = vunpack.c.l.b16 %v396
    %v1267 = vunpack.c.h.b16 %v396
    %v1268 = vunpack.c.l.b16 %v397
    %v1269 = vunpack.c.h.b16 %v397
    %v1270 = vunpack.c.l.b16 %v398
    %v1271 = vunpack.c.h.b16 %v398
    %v1272 = vunpack.c.l.b16 %v399
    %v1273 = vunpack.c.h.b16 %v399
    %v1274 = vunpack.c.l.b16 %v400
    %v1275 = vunpack.c.h.b16 %v400
    %v1276 = vunpack.c.l.b16 %v401
    %v1277 = vunpack.c.h.b16 %v401
    %v1278 = vunpack.c.l.b16 %v402
    %v1279 = vunpack.c.h.b16 %v402
    %v1280 = vunpack.c.l.b16 %v403
    %v1281 = vunpack.c.h.b16 %v403
    %v1282 = vunpack.c.l.b16 %v404
    %v1283 = vunpack.c.h.b16 %v404
    %v1284 = vunpack.c.l.b16 %v405
    %v1285 = vunpack.c.h.b16 %v405
    %v1286 = vunpack.c.l.b16 %v406
    %v1287 = vunpack.c.h.b16 %v406
    %v1288 = vunpack.c.l.b16 %v407
    %v1289 = vunpack.c.h.b16 %v407
    %v1290 = vunpack.c.l.b16 %v408
    %v1291 = vunpack.c.h.b16 %v408
    %v1292 = vunpack.c.l.b16 %v409
    %v1293 = vunpack.c.h.b16 %v409
    %v1294 = vunpack.c.l.b16 %v410
    %v1295 = vunpack.c.h.b16 %v410
    %v1296 = vunpack.c.l.b16 %v411
    %v1297 = vunpack.c.h.b16 %v411
    %v1298 = vunpack.c.l.b16 %v412
    %v1299 = vunpack.c.h.b16 %v412
    %v1300 = vunpack.c.l.b16 %v413
    %v1301 = vunpack.c.h.b16 %v413
    %v1302 = vunpack.c.l.b16 %v414
    %v1303 = vunpack.c.h.b16 %v414
    %v1304 = vunpack.c.l.b16 %v415
    %v1305 = vunpack.c.h.b16 %v415
    %v1306 = vunpack.c.l.b16 %v416
    %v1307 = vunpack.c.h.b16 %v416
    %v1308 = vunpack.c.l.b16 %v417
    %v1309 = vunpack.c.h.b16 %v417
    %v1310 = vunpack.c.l.b16 %v418
    %v1311 = vunpack.c.h.b16 %v418
    %v1312 = vunpack.c.l.b16 %v419
    %v1313 = vunpack.c.h.b16 %v419
    %v1314 = vunpack.c.l.b16 %v420
    %v1315 = vunpack.c.h.b16 %v420
    %v1316 = vunpack.c.l.b16 %v421
    %v1317 = vunpack.c.h.b16 %v421
    %v1318 = vunpack.c.l.b16 %v422
    %v1319 = vunpack.c.h.b16 %v422
    %v1320 = vunpack.c.l.b16 %v423
    %v1321 = vunpack.c.h.b16 %v423
    %v1322 = vunpack.c.l.b16 %v424
    %v1323 = vunpack.c.h.b16 %v424
    %v1324 = vunpack.c.l.b16 %v425
    %v1325 = vunpack.c.h.b16 %v425
    %v1326 = vunpack.c.l.b16 %v426
    %v1327 = vunpack.c.h.b16 %v426
    %v1328 = vunpack.c.l.b16 %v427
    %v1329 = vunpack.c.h.b16 %v427
    %v1330 = vunpack.c.l.b16 %v428
    %v1331 = vunpack.c.h.b16 %v428
    %v1332 = vunpack.c.l.b16 %v429
    %v1333 = vunpack.c.h.b16 %v429
    %v1334 = vunpack.c.l.b16 %v430
    %v1335 = vunpack.c.h.b16 %v430
    %v1336 = vunpack.c.l.b16 %v431
    %v1337 = vunpack.c.h.b16 %v431
    %v1338 = vunpack.c.l.b16 %v432
    %v1339 = vunpack.c.h.b16 %v432
    %v1340 = vunpack.c.l.b16 %v433
    %v1341 = vunpack.c.h.b16 %v433
    %v1342 = vunpack.c.l.b16 %v434
    %v1343 = vunpack.c.h.b16 %v434
    %v1344 = vunpack.c.l.b16 %v435
    %v1345 = vunpack.c.h.b16 %v435
    %v1346 = vunpack.c.l.b16 %v436
    %v1347 = vunpack.c.h.b16 %v436
    %v1348 = vunpack.c.l.b16 %v437
    %v1349 = vunpack.c.h.b16 %v437
    %v1350 = vunpack.c.l.b16 %v438
    %v1351 = vunpack.c.h.b16 %v438
    %v1352 = vunpack.c.l.b16 %v439
    %v1353 = vunpack.c.h.b16 %v439
    %v1354 = vunpack.c.l.b16 %v440
    %v1355 = vunpack.c.h.b16 %v440
    %v1356 = vunpack.c.l.b16 %v441
    %v1357 = vunpack.c.h.b16 %v441
    %v1358 = vunpack.c.l.b16 %v442
    %v1359 = vunpack.c.h.b16 %v442
    %v1360 = vunpack.c.l.b16 %v443
    %v1361 = vunpack.c.h.b16 %v443
    %v1362 = vunpack.c.l.b16 %v444
    %v1363 = vunpack.c.h.b16 %v444
    %v1364 = vunpack.c.l.b16 %v445
    %v1365 = vunpack.c.h.b16 %v445
    %v1366 = vunpack.c.l.b16 %v446
    %v1367 = vunpack.c.h.b16 %v446
    %v1368 = vunpack.c.l.b16 %v447
    %v1369 = vunpack.c.h.b16 %v447
    %v1370 = vunpack.c.l.b16 %v448
    %v1371 = vunpack.c.h.b16 %v448
    %v1372 = vunpack.c.l.b16 %v449
    %v1373 = vunpack.c.h.b16 %v449
    %v1374 = vunpack.c.l.b16 %v450
    %v1375 = vunpack.c.h.b16 %v450
    %v1376 = vunpack.c.l.b16 %v451
    %v1377 = vunpack.c.h.b16 %v451
    %v1378 = vunpack.c.l.b16 %v452
    %v1379 = vunpack.c.h.b16 %v452
    %v1380 = vunpack.c.l.b16 %v453
    %v1381 = vunpack.c.h.b16 %v453
    %v1382 = vunpack.c.l.b16 %v454
    %v1383 = vunpack.c.h.b16 %v454
    %v1384 = vunpack.c.l.b16 %v455
    %v1385 = vunpack.c.h.b16 %v455
    %v1386 = vunpack.c.l.b16 %v456
    %v1387 = vunpack.c.h.b16 %v456
    %v1388 = vunpack.c.l.b16 %v457
    %v1389 = vunpack.c.h.b16 %v457
    %v1390 = vunpack.c.l.b16 %v458
    %v1391 = vunpack.c.h.b16 %v458
    %v1392 = vunpack.c.l.b16 %v459
    %v1393 = vunpack.c.h.b16 %v459
    %v1394 = vunpack.c.l.b16 %v460
    %v1395 = vunpack.c.h.b16 %v460
    %v1396 = vunpack.c.l.b16 %v461
    %v1397 = vunpack.c.h.b16 %v461
    %v1398 = vpack.c.b16 %v918, %v886
    %v1399 = vpack.c.b16 %v919, %v887
    %v1400 = vpack.c.b16 %v920, %v888
    %v1401 = vpack.c.b16 %v921, %v889
    %v1402 = vpack.c.b16 %v922, %v890
    %v1403 = vpack.c.b16 %v923, %v891
    %v1404 = vpack.c.b16 %v924, %v892
    %v1405 = vpack.c.b16 %v925, %v893
    %v1406 = vpack.c.b16 %v926, %v894
    %v1407 = vpack.c.b16 %v927, %v895
    %v1408 = vpack.c.b16 %v928, %v896
    %v1409 = vpack.c.b16 %v929, %v897
    %v1410 = vpack.c.b16 %v930, %v898
    %v1411 = vpack.c.b16 %v931, %v899
    %v1412 = vpack.c.b16 %v932, %v900
    %v1413 = vpack.c.b16 %v933, %v901
    %v1414 = vpack.c.b16 %v934, %v902
    %v1415 = vpack.c.b16 %v935, %v903
    %v1416 = vpack.c.b16 %v936, %v904
    %v1417 = vpack.c.b16 %v937, %v905
    %v1418 = vpack.c.b16 %v938, %v906
    %v1419 = vpack.c.b16 %v939, %v907
    %v1420 = vpack.c.b16 %v940, %v908
    %v1421 = vpack.c.b16 %v941, %v909
    %v1422 = vpack.c.b16 %v942, %v910
    %v1423 = vpack.c.b16 %v943, %v911
    %v1424 = vpack.c.b16 %v944, %v912
    %v1425 = vpack.c.b16 %v945, %v913
    %v1426 = vpack.c.b16 %v946, %v914
    %v1427 = vpack.c.b16 %v947, %v915
    %v1428 = vpack.c.b16 %v948, %v916
    %v1429 = vpack.c.b16 %v949, %v917
    %v1430 = vpack.c.b16 %v982, %v950
    %v1431 = vpack.c.b16 %v983, %v951
    %v1432 = vpack.c.b16 %v984, %v952
    %v1433 = vpack.c.b16 %v985, %v953
    %v1434 = vpack.c.b16 %v986, %v954
    %v1435 = vpack.c.b16 %v987, %v955
    %v1436 = vpack.c.b16 %v988, %v956
    %v1437 = vpack.c.b16 %v989, %v957
    %v1438 = vpack.c.b16 %v990, %v958
    %v1439 = vpack.c.b16 %v991, %v959
    %v1440 = vpack.c.b16 %v992, %v960
    %v1441 = vpack.c.b16 %v993, %v961
    %v1442 = vpack.c.b16 %v994, %v962
    %v1443 = vpack.c.b16 %v995, %v963
    %v1444 = vpack.c.b16 %v996, %v964
    %v1445 = vpack.c.b16 %v997, %v965
    %v1446 = vpack.c.b16 %v998, %v966
    %v1447 = vpack.c.b16 %v999, %v967
    %v1448 = vpack.c.b16 %v1000, %v968
    %v1449 = vpack.c.b16 %v1001, %v969
    %v1450 = vpack.c.b16 %v1002, %v970
    %v1451 = vpack.c.b16 %v1003, %v971
    %v1452 = vpack.c.b16 %v1004, %v972
    %v1453 = vpack.c.b16 %v1005, %v973
    %v1454 = vpack.c.b16 %v1006, %v974
    %v1455 = vpack.c.b16 %v1007, %v975
    %v1456 = vpack.c.b16 %v1008, %v976
    %v1457 = vpack.c.b16 %v1009, %v977
    %v1458 = vpack.c.b16 %v1010, %v978
    %v1459 = vpack.c.b16 %v1011, %v979
    %v1460 = vpack.c.b16 %v1012, %v980
    %v1461 = vpack.c.b16 %v1013, %v981
    %v1462 = vpack.c.b16 %v1046, %v1014
    %v1463 = vpack.c.b16 %v1047, %v1015
    %v1464 = vpack.c.b16 %v1048, %v1016
    %v1465 = vpack.c.b16 %v1049, %v1017
    %v1466 = vpack.c.b16 %v1050, %v1018
    %v1467 = vpack.c.b16 %v1051, %v1019
    %v1468 = vpack.c.b16 %v1052, %v1020
    %v1469 = vpack.c.b16 %v1053, %v1021
    %v1470 = vpack.c.b16 %v1054, %v1022
    %v1471 = vpack.c.b16 %v1055, %v1023
    %v1472 = vpack.c.b16 %v1056, %v1024
    %v1473 = vpack.c.b16 %v1057, %v1025
    %v1474 = vpack.c.b16 %v1058, %v1026
    %v1475 = vpack.c.b16 %v1059, %v1027
    %v1476 = vpack.c.b16 %v1060, %v1028
    %v1477 = vpack.c.b16 %v1061, %v1029
    %v1478 = vpack.c.b16 %v1062, %v1030
    %v1479 = vpack.c.b16 %v1063, %v1031
    %v1480 = vpack.c.b16 %v1064, %v1032
    %v1481 = vpack.c.b16 %v1065, %v1033
    %v1482 = vpack.c.b16 %v1066, %v1034
    %v1483 = vpack.c.b16 %v1067, %v1035
    %v1484 = vpack.c.b16 %v1068, %v1036
    %v1485 = vpack.c.b16 %v1069, %v1037
    %v1486 = vpack.c.b16 %v1070, %v1038
    %v1487 = vpack.c.b16 %v1071, %v1039
    %v1488 = vpack.c.b16 %v1072, %v1040
    %v1489 = vpack.c.b16 %v1073, %v1041
    %v1490 = vpack.c.b16 %v1074, %v1042
    %v1491 = vpack.c.b16 %v1075, %v1043
    %v1492 = vpack.c.b16 %v1076, %v1044
    %v1493 = vpack.c.b16 %v1077, %v1045
    %v1494 = vpack.c.b16 %v1110, %v1078
    %v1495 = vpack.c.b16 %v1111, %v1079
    %v1496 = vpack.c.b16 %v1112, %v1080
    %v1497 = vpack.c.b16 %v1113, %v1081
    %v1498 = vpack.c.b16 %v1114, %v1082
    %v1499 = vpack.c.b16 %v1115, %v1083
    %v1500 = vpack.c.b16 %v1116, %v1084
    %v1501 = vpack.c.b16 %v1117, %v1085
    %v1502 = vpack.c.b16 %v1118, %v1086
    %v1503 = vpack.c.b16 %v1119, %v1087
    %v1504 = vpack.c.b16 %v1120, %v1088
    %v1505 = vpack.c.b16 %v1121, %v1089
    %v1506 = vpack.c.b16 %v1122, %v1090
    %v1507 = vpack.c.b16 %v1123, %v1091
    %v1508 = vpack.c.b16 %v1124, %v1092
    %v1509 = vpack.c.b16 %v1125, %v1093
    %v1510 = vpack.c.b16 %v1126, %v1094
    %v1511 = vpack.c.b16 %v1127, %v1095
    %v1512 = vpack.c.b16 %v1128, %v1096
    %v1513 = vpack.c.b16 %v1129, %v1097
    %v1514 = vpack.c.b16 %v1130, %v1098
    %v1515 = vpack.c.b16 %v1131, %v1099
    %v1516 = vpack.c.b16 %v1132, %v1100
    %v1517 = vpack.c.b16 %v1133, %v1101
    %v1518 = vpack.c.b16 %v1134, %v1102
    %v1519 = vpack.c.b16 %v1135, %v1103
    %v1520 = vpack.c.b16 %v1136, %v1104
    %v1521 = vpack.c.b16 %v1137, %v1105
    %v1522 = vpack.c.b16 %v1138, %v1106
    %v1523 = vpack.c.b16 %v1139, %v1107
    %v1524 = vpack.c.b16 %v1140, %v1108
    %v1525 = vpack.c.b16 %v1141, %v1109
    %v1526 = vpack.c.b16 %v1174, %v1142
    %v1527 = vpack.c.b16 %v1175, %v1143
    %v1528 = vpack.c.b16 %v1176, %v1144
    %v1529 = vpack.c.b16 %v1177, %v1145
    %v1530 = vpack.c.b16 %v1178, %v1146
    %v1531 = vpack.c.b16 %v1179, %v1147
    %v1532 = vpack.c.b16 %v1180, %v1148
    %v1533 = vpack.c.b16 %v1181, %v1149
    %v1534 = vpack.c.b16 %v1182, %v1150
    %v1535 = vpack.c.b16 %v1183, %v1151
    %v1536 = vpack.c.b16 %v1184, %v1152
    %v1537 = vpack.c.b16 %v1185, %v1153
    %v1538 = vpack.c.b16 %v1186, %v1154
    %v1539 = vpack.c.b16 %v1187, %v1155
    %v1540 = vpack.c.b16 %v1188, %v1156
    %v1541 = vpack.c.b16 %v1189, %v1157
    %v1542 = vpack.c.b16 %v1190, %v1158
    %v1543 = vpack.c.b16 %v1191, %v1159
    %v1544 = vpack.c.b16 %v1192, %v1160
    %v1545 = vpack.c.b16 %v1193, %v1161
    %v1546 = vpack.c.b16 %v1194, %v1162
    %v1547 = vpack.c.b16 %v1195, %v1163
    %v1548 = vpack.c.b16 %v1196, %v1164
    %v1549 = vpack.c.b16 %v1197, %v1165
    %v1550 = vpack.c.b16 %v1198, %v1166
    %v1551 = vpack.c.b16 %v1199, %v1167
    %v1552 = vpack.c.b16 %v1200, %v1168
    %v1553 = vpack.c.b16 %v1201, %v1169
    %v1554 = vpack.c.b16 %v1202, %v1170
    %v1555 = vpack.c.b16 %v1203, %v1171
    %v1556 = vpack.c.b16 %v1204, %v1172
    %v1557 = vpack.c.b16 %v1205, %v1173
    %v1558 = vpack.c.b16 %v1238, %v1206
    %v1559 = vpack.c.b16 %v1239, %v1207
    %v1560 = vpack.c.b16 %v1240, %v1208
    %v1561 = vpack.c.b16 %v1241, %v1209
    %v1562 = vpack.c.b16 %v1242, %v1210
    %v1563 = vpack.c.b16 %v1243, %v1211
    %v1564 = vpack.c.b16 %v1244, %v1212
    %v1565 = vpack.c.b16 %v1245, %v1213
    %v1566 = vpack.c.b16 %v1246, %v1214
    %v1567 = vpack.c.b16 %v1247, %v1215
    %v1568 = vpack.c.b16 %v1248, %v1216
    %v1569 = vpack.c.b16 %v1249, %v1217
    %v1570 = vpack.c.b16 %v1250, %v1218
    %v1571 = vpack.c.b16 %v1251, %v1219
    %v1572 = vpack.c.b16 %v1252, %v1220
    %v1573 = vpack.c.b16 %v1253, %v1221
    %v1574 = vpack.c.b16 %v1254, %v1222
    %v1575 = vpack.c.b16 %v1255, %v1223
    %v1576 = vpack.c.b16 %v1256, %v1224
    %v1577 = vpack.c.b16 %v1257, %v1225
    %v1578 = vpack.c.b16 %v1258, %v1226
    %v1579 = vpack.c.b16 %v1259, %v1227
    %v1580 = vpack.c.b16 %v1260, %v1228
    %v1581 = vpack.c.b16 %v1261, %v1229
    %v1582 = vpack.c.b16 %v1262, %v1230
    %v1583 = vpack.c.b16 %v1263, %v1231
    %v1584 = vpack.c.b16 %v1264, %v1232
    %v1585 = vpack.c.b16 %v1265, %v1233
    %v1586 = vpack.c.b16 %v1266, %v1234
    %v1587 = vpack.c.b16 %v1267, %v1235
    %v1588 = vpack.c.b16 %v1268, %v1236
    %v1589 = vpack.c.b16 %v1269, %v1237
    %v1590 = vpack.c.b16 %v1302, %v1270
    %v1591 = vpack.c.b16 %v1303, %v1271
    %v1592 = vpack.c.b16 %v1304, %v1272
    %v1593 = vpack.c.b16 %v1305, %v1273
    %v1594 = vpack.c.b16 %v1306, %v1274
    %v1595 = vpack.c.b16 %v1307, %v1275
    %v1596 = vpack.c.b16 %v1308, %v1276
    %v1597 = vpack.c.b16 %v1309, %v1277
    %v1598 = vpack.c.b16 %v1310, %v1278
    %v1599 = vpack.c.b16 %v1311, %v1279
    %v1600 = vpack.c.b16 %v1312, %v1280
    %v1601 = vpack.c.b16 %v1313, %v1281
    %v1602 = vpack.c.b16 %v1314, %v1282
    %v1603 = vpack.c.b16 %v1315, %v1283
    %v1604 = vpack.c.b16 %v1316, %v1284
    %v1605 = vpack.c.b16 %v1317, %v1285
    %v1606 = vpack.c.b16 %v1318, %v1286
    %v1607 = vpack.c.b16 %v1319, %v1287
    %v1608 = vpack.c.b16 %v1320, %v1288
    %v1609 = vpack.c.b16 %v1321, %v1289
    %v1610 = vpack.c.b16 %v1322, %v1290
    %v1611 = vpack.c.b16 %v1323, %v1291
    %v1612 = vpack.c.b16 %v1324, %v1292
    %v1613 = vpack.c.b16 %v1325, %v1293
    %v1614 = vpack.c.b16 %v1326, %v1294
    %v1615 = vpack.c.b16 %v1327, %v1295
    %v1616 = vpack.c.b16 %v1328, %v1296
    %v1617 = vpack.c.b16 %v1329, %v1297
    %v1618 = vpack.c.b16 %v1330, %v1298
    %v1619 = vpack.c.b16 %v1331, %v1299
    %v1620 = vpack.c.b16 %v1332, %v1300
    %v1621 = vpack.c.b16 %v1333, %v1301
    %v1622 = vpack.c.b16 %v1366, %v1334
    %v1623 = vpack.c.b16 %v1367, %v1335
    %v1624 = vpack.c.b16 %v1368, %v1336
    %v1625 = vpack.c.b16 %v1369, %v1337
    %v1626 = vpack.c.b16 %v1370, %v1338
    %v1627 = vpack.c.b16 %v1371, %v1339
    %v1628 = vpack.c.b16 %v1372, %v1340
    %v1629 = vpack.c.b16 %v1373, %v1341
    %v1630 = vpack.c.b16 %v1374, %v1342
    %v1631 = vpack.c.b16 %v1375, %v1343
    %v1632 = vpack.c.b16 %v1376, %v1344
    %v1633 = vpack.c.b16 %v1377, %v1345
    %v1634 = vpack.c.b16 %v1378, %v1346
    %v1635 = vpack.c.b16 %v1379, %v1347
    %v1636 = vpack.c.b16 %v1380, %v1348
    %v1637 = vpack.c.b16 %v1381, %v1349
    %v1638 = vpack.c.b16 %v1382, %v1350
    %v1639 = vpack.c.b16 %v1383, %v1351
    %v1640 = vpack.c.b16 %v1384, %v1352
    %v1641 = vpack.c.b16 %v1385, %v1353
    %v1642 = vpack.c.b16 %v1386, %v1354
    %v1643 = vpack.c.b16 %v1387, %v1355
    %v1644 = vpack.c.b16 %v1388, %v1356
    %v1645 = vpack.c.b16 %v1389, %v1357
    %v1646 = vpack.c.b16 %v1390, %v1358
    %v1647 = vpack.c.b16 %v1391, %v1359
    %v1648 = vpack.c.b16 %v1392, %v1360
    %v1649 = vpack.c.b16 %v1393, %v1361
    %v1650 = vpack.c.b16 %v1394, %v1362
    %v1651 = vpack.c.b16 %v1395, %v1363
    %v1652 = vpack.c.b16 %v1396, %v1364
    %v1653 = vpack.c.b16 %v1397, %v1365
    %1910 = vmatprep.subr.bf16.mxu0 %v1399
    %1911 = vmatpush1.bf16.msra.mxu0 %v1398
    %1912 = vmatprep.subr.bf16.mxu0 %v1431
    %1913 = vmatpush1.bf16.msra.mxu0 %v1430
    %1914 = vmatprep.subr.bf16.mxu0 %v1463
    %1915 = vmatpush1.bf16.msra.mxu0 %v1462
    %1916 = vmatprep.subr.bf16.mxu0 %v1495
    %1917 = vmatpush1.bf16.msra.mxu0 %v1494
    %1918 = vmatprep.subr.bf16.mxu0 %v1527
    %1919 = vmatpush1.bf16.msra.mxu0 %v1526
    %1920 = vmatprep.subr.bf16.mxu0 %v1559
    %1921 = vmatpush1.bf16.msra.mxu0 %v1558
    %1922 = vmatprep.subr.bf16.mxu0 %v1591
    %1923 = vmatpush1.bf16.msra.mxu0 %v1590
    %1924 = vmatprep.subr.bf16.mxu0 %v1623
    %1925 = vmatpush1.bf16.msra.mxu0 %v1622
    %1926 = vmatprep.subr.bf16.mxu0 0
    %1927 = vmatpush1.bf16.msra.mxu0 0
    %1928 = vmatprep.subr.bf16.mxu0 0
    %1929 = vmatpush1.bf16.msra.mxu0 0
    %1930 = vmatprep.subr.bf16.mxu0 0
    %1931 = vmatpush1.bf16.msra.mxu0 0
    %1932 = vmatprep.subr.bf16.mxu0 0
    %1933 = vmatpush1.bf16.msra.mxu0 0
    %1934 = vmatprep.subr.bf16.mxu0 0
    %1935 = vmatpush1.bf16.msra.mxu0 0
    %1936 = vmatprep.subr.bf16.mxu0 0
    %1937 = vmatpush1.bf16.msra.mxu0 0
    %1938 = vmatprep.subr.bf16.mxu0 0
    %1939 = vmatpush1.bf16.msra.mxu0 0
    %1940 = vmatprep.subr.bf16.mxu0 0
    %1941 = vmatpush1.bf16.msra.mxu0 0
    %1942 = vmatprep.mubr.bf16.mxu0 0
    %1943 = vmatmul.mubr.bf16.gmra.mrb[0].mxu0 %v204
    %v1944 = vpop.f32.mrb[0].mxu0
    %v1945 = vadd.f32 %v473, %v1944
    %v1946 = vpop.f32.mrb[0].mxu0
    %v1947 = vadd.f32 %v477, %v1946
    %v1948 = vpop.f32.mrb[0].mxu0
    %v1949 = vadd.f32 %v473, %v1948
    %v1950 = vpop.f32.mrb[0].mxu0
    %v1951 = vadd.f32 %v477, %v1950
    %1952 = vmatprep.mubr.bf16.mxu0 0
    %1953 = vmatmul.mubr.bf16.gmra.mrb[0].mxu0 %v205
    %v1954 = vpop.f32.mrb[0].mxu0
    %v1955 = vadd.f32 %v473, %v1954
    %v1956 = vpop.f32.mrb[0].mxu0
    %v1957 = vadd.f32 %v477, %v1956
    %v1958 = vpop.f32.mrb[0].mxu0
    %v1959 = vpop.f32.mrb[0].mxu0
    %1960 = vdwg.mxu0
    %1961 = vmatprep.subr.bf16.mxu0 %v1401
    %1962 = vmatpush1.bf16.msra.mxu0 %v1400
    %1963 = vmatprep.subr.bf16.mxu0 %v1433
    %1964 = vmatpush1.bf16.msra.mxu0 %v1432
    %1965 = vmatprep.subr.bf16.mxu0 %v1465
    %1966 = vmatpush1.bf16.msra.mxu0 %v1464
    %1967 = vmatprep.subr.bf16.mxu0 %v1497
    %1968 = vmatpush1.bf16.msra.mxu0 %v1496
    %1969 = vmatprep.subr.bf16.mxu0 %v1529
    %1970 = vmatpush1.bf16.msra.mxu0 %v1528
    %1971 = vmatprep.subr.bf16.mxu0 %v1561
    %1972 = vmatpush1.bf16.msra.mxu0 %v1560
    %1973 = vmatprep.subr.bf16.mxu0 %v1593
    %1974 = vmatpush1.bf16.msra.mxu0 %v1592
    %1975 = vmatprep.subr.bf16.mxu0 %v1625
    %1976 = vmatpush1.bf16.msra.mxu0 %v1624
    %1977 = vmatprep.subr.bf16.mxu0 0
    %1978 = vmatpush1.bf16.msra.mxu0 0
    %1979 = vmatprep.subr.bf16.mxu0 0
    %1980 = vmatpush1.bf16.msra.mxu0 0
    %1981 = vmatprep.subr.bf16.mxu0 0
    %1982 = vmatpush1.bf16.msra.mxu0 0
    %1983 = vmatprep.subr.bf16.mxu0 0
    %1984 = vmatpush1.bf16.msra.mxu0 0
    %1985 = vmatprep.subr.bf16.mxu0 0
    %1986 = vmatpush1.bf16.msra.mxu0 0
    %1987 = vmatprep.subr.bf16.mxu0 0
    %1988 = vmatpush1.bf16.msra.mxu0 0
    %1989 = vmatprep.subr.bf16.mxu0 0
    %1990 = vmatpush1.bf16.msra.mxu0 0
    %1991 = vmatprep.subr.bf16.mxu0 0
    %1992 = vmatpush1.bf16.msra.mxu0 0
    %1993 = vmatprep.mubr.bf16.mxu0 0
    %1994 = vmatmul.mubr.bf16.gmra.mrb[0].mxu0 %v204
    %v1995 = vpop.f32.mrb[0].mxu0
    %v1996 = vadd.f32 %v481, %v1995
    %v1997 = vpop.f32.mrb[0].mxu0
    %v1998 = vadd.f32 %v485, %v1997
    %v1999 = vpop.f32.mrb[0].mxu0
    %v2000 = vadd.f32 %v481, %v1999
    %v2001 = vpop.f32.mrb[0].mxu0
    %v2002 = vadd.f32 %v485, %v2001
    %2003 = vmatprep.mubr.bf16.mxu0 0
    %2004 = vmatmul.mubr.bf16.gmra.mrb[0].mxu0 %v205
    %v2005 = vpop.f32.mrb[0].mxu0
    %v2006 = vadd.f32 %v481, %v2005
    %v2007 = vpop.f32.mrb[0].mxu0
    %v2008 = vadd.f32 %v485, %v2007
    %v2009 = vpop.f32.mrb[0].mxu0
    %v2010 = vpop.f32.mrb[0].mxu0
    %2011 = vdwg.mxu0
    %2012 = vmatprep.subr.bf16.mxu0 %v1403
    %2013 = vmatpush1.bf16.msra.mxu0 %v1402
    %2014 = vmatprep.subr.bf16.mxu0 %v1435
    %2015 = vmatpush1.bf16.msra.mxu0 %v1434
    %2016 = vmatprep.subr.bf16.mxu0 %v1467
    %2017 = vmatpush1.bf16.msra.mxu0 %v1466
    %2018 = vmatprep.subr.bf16.mxu0 %v1499
    %2019 = vmatpush1.bf16.msra.mxu0 %v1498
    %2020 = vmatprep.subr.bf16.mxu0 %v1531
    %2021 = vmatpush1.bf16.msra.mxu0 %v1530
    %2022 = vmatprep.subr.bf16.mxu0 %v1563
    %2023 = vmatpush1.bf16.msra.mxu0 %v1562
    %2024 = vmatprep.subr.bf16.mxu0 %v1595
    %2025 = vmatpush1.bf16.msra.mxu0 %v1594
    %2026 = vmatprep.subr.bf16.mxu0 %v1627
    %2027 = vmatpush1.bf16.msra.mxu0 %v1626
    %2028 = vmatprep.subr.bf16.mxu0 0
    %2029 = vmatpush1.bf16.msra.mxu0 0
    %2030 = vmatprep.subr.bf16.mxu0 0
    %2031 = vmatpush1.bf16.msra.mxu0 0
    %2032 = vmatprep.subr.bf16.mxu0 0
    %2033 = vmatpush1.bf16.msra.mxu0 0
    %2034 = vmatprep.subr.bf16.mxu0 0
    %2035 = vmatpush1.bf16.msra.mxu0 0
    %2036 = vmatprep.subr.bf16.mxu0 0
    %2037 = vmatpush1.bf16.msra.mxu0 0
    %2038 = vmatprep.subr.bf16.mxu0 0
    %2039 = vmatpush1.bf16.msra.mxu0 0
    %2040 = vmatprep.subr.bf16.mxu0 0
    %2041 = vmatpush1.bf16.msra.mxu0 0
    %2042 = vmatprep.subr.bf16.mxu0 0
    %2043 = vmatpush1.bf16.msra.mxu0 0
    %2044 = vmatprep.mubr.bf16.mxu0 0
    %2045 = vmatmul.mubr.bf16.gmra.mrb[0].mxu0 %v204
    %v2046 = vpop.f32.mrb[0].mxu0
    %v2047 = vadd.f32 %v489, %v2046
    %v2048 = vpop.f32.mrb[0].mxu0
    %v2049 = vadd.f32 %v493, %v2048
    %v2050 = vpop.f32.mrb[0].mxu0
    %v2051 = vadd.f32 %v489, %v2050
    %v2052 = vpop.f32.mrb[0].mxu0
    %v2053 = vadd.f32 %v493, %v2052
    %2054 = vmatprep.mubr.bf16.mxu0 0
    %2055 = vmatmul.mubr.bf16.gmra.mrb[0].mxu0 %v205
    %v2056 = vpop.f32.mrb[0].mxu0
    %v2057 = vadd.f32 %v489, %v2056
    %v2058 = vpop.f32.mrb[0].mxu0
    %v2059 = vadd.f32 %v493, %v2058
    %v2060 = vpop.f32.mrb[0].mxu0
    %v2061 = vpop.f32.mrb[0].mxu0
    %2062 = vdwg.mxu0
    %2063 = vmatprep.subr.bf16.mxu0 %v1405
    %2064 = vmatpush1.bf16.msra.mxu0 %v1404
    %2065 = vmatprep.subr.bf16.mxu0 %v1437
    %2066 = vmatpush1.bf16.msra.mxu0 %v1436
    %2067 = vmatprep.subr.bf16.mxu0 %v1469
    %2068 = vmatpush1.bf16.msra.mxu0 %v1468
    %2069 = vmatprep.subr.bf16.mxu0 %v1501
    %2070 = vmatpush1.bf16.msra.mxu0 %v1500
    %2071 = vmatprep.subr.bf16.mxu0 %v1533
    %2072 = vmatpush1.bf16.msra.mxu0 %v1532
    %2073 = vmatprep.subr.bf16.mxu0 %v1565
    %2074 = vmatpush1.bf16.msra.mxu0 %v1564
    %2075 = vmatprep.subr.bf16.mxu0 %v1597
    %2076 = vmatpush1.bf16.msra.mxu0 %v1596
    %2077 = vmatprep.subr.bf16.mxu0 %v1629
    %2078 = vmatpush1.bf16.msra.mxu0 %v1628
    %2079 = vmatprep.subr.bf16.mxu0 0
    %2080 = vmatpush1.bf16.msra.mxu0 0
    %2081 = vmatprep.subr.bf16.mxu0 0
    %2082 = vmatpush1.bf16.msra.mxu0 0
    %2083 = vmatprep.subr.bf16.mxu0 0
    %2084 = vmatpush1.bf16.msra.mxu0 0
    %2085 = vmatprep.subr.bf16.mxu0 0
    %2086 = vmatpush1.bf16.msra.mxu0 0
    %2087 = vmatprep.subr.bf16.mxu0 0
    %2088 = vmatpush1.bf16.msra.mxu0 0
    %2089 = vmatprep.subr.bf16.mxu0 0
    %2090 = vmatpush1.bf16.msra.mxu0 0
    %2091 = vmatprep.subr.bf16.mxu0 0
    %2092 = vmatpush1.bf16.msra.mxu0 0
    %2093 = vmatprep.subr.bf16.mxu0 0
    %2094 = vmatpush1.bf16.msra.mxu0 0
    %2095 = vmatprep.mubr.bf16.mxu0 0
    %2096 = vmatmul.mubr.bf16.gmra.mrb[0].mxu0 %v204
    %v2097 = vpop.f32.mrb[0].mxu0
    %v2098 = vadd.f32 %v497, %v2097
    %v2099 = vpop.f32.mrb[0].mxu0
    %v2100 = vadd.f32 %v501, %v2099
    %v2101 = vpop.f32.mrb[0].mxu0
    %v2102 = vadd.f32 %v497, %v2101
    %v2103 = vpop.f32.mrb[0].mxu0
    %v2104 = vadd.f32 %v501, %v2103
    %2105 = vmatprep.mubr.bf16.mxu0 0
    %2106 = vmatmul.mubr.bf16.gmra.mrb[0].mxu0 %v205
    %v2107 = vpop.f32.mrb[0].mxu0
    %v2108 = vadd.f32 %v497, %v2107
    %v2109 = vpop.f32.mrb[0].mxu0
    %v2110 = vadd.f32 %v501, %v2109
    %v2111 = vpop.f32.mrb[0].mxu0
    %v2112 = vpop.f32.mrb[0].mxu0
    %2113 = vdwg.mxu0
    %2114 = vmatprep.subr.bf16.mxu0 %v1407
    %2115 = vmatpush1.bf16.msra.mxu0 %v1406
    %2116 = vmatprep.subr.bf16.mxu0 %v1439
    %2117 = vmatpush1.bf16.msra.mxu0 %v1438
    %2118 = vmatprep.subr.bf16.mxu0 %v1471
    %2119 = vmatpush1.bf16.msra.mxu0 %v1470
    %2120 = vmatprep.subr.bf16.mxu0 %v1503
    %2121 = vmatpush1.bf16.msra.mxu0 %v1502
    %2122 = vmatprep.subr.bf16.mxu0 %v1535
    %2123 = vmatpush1.bf16.msra.mxu0 %v1534
    %2124 = vmatprep.subr.bf16.mxu0 %v1567
    %2125 = vmatpush1.bf16.msra.mxu0 %v1566
    %2126 = vmatprep.subr.bf16.mxu0 %v1599
    %2127 = vmatpush1.bf16.msra.mxu0 %v1598
    %2128 = vmatprep.subr.bf16.mxu0 %v1631
    %2129 = vmatpush1.bf16.msra.mxu0 %v1630
    %2130 = vmatprep.subr.bf16.mxu0 0
    %2131 = vmatpush1.bf16.msra.mxu0 0
    %2132 = vmatprep.subr.bf16.mxu0 0
    %2133 = vmatpush1.bf16.msra.mxu0 0
    %2134 = vmatprep.subr.bf16.mxu0 0
    %2135 = vmatpush1.bf16.msra.mxu0 0
    %2136 = vmatprep.subr.bf16.mxu0 0
    %2137 = vmatpush1.bf16.msra.mxu0 0
    %2138 = vmatprep.subr.bf16.mxu0 0
    %2139 = vmatpush1.bf16.msra.mxu0 0
    %2140 = vmatprep.subr.bf16.mxu0 0
    %2141 = vmatpush1.bf16.msra.mxu0 0
    %2142 = vmatprep.subr.bf16.mxu0 0
    %2143 = vmatpush1.bf16.msra.mxu0 0
    %2144 = vmatprep.subr.bf16.mxu0 0
    %2145 = vmatpush1.bf16.msra.mxu0 0
    %2146 = vmatprep.mubr.bf16.mxu0 0
    %2147 = vmatmul.mubr.bf16.gmra.mrb[0].mxu0 %v204
    %v2148 = vpop.f32.mrb[0].mxu0
    %v2149 = vadd.f32 %v505, %v2148
    %v2150 = vpop.f32.mrb[0].mxu0
    %v2151 = vadd.f32 %v509, %v2150
    %v2152 = vpop.f32.mrb[0].mxu0
    %v2153 = vadd.f32 %v505, %v2152
    %v2154 = vpop.f32.mrb[0].mxu0
    %v2155 = vadd.f32 %v509, %v2154
    %2156 = vmatprep.mubr.bf16.mxu0 0
    %2157 = vmatmul.mubr.bf16.gmra.mrb[0].mxu0 %v205
    %v2158 = vpop.f32.mrb[0].mxu0
    %v2159 = vadd.f32 %v505, %v2158
    %v2160 = vpop.f32.mrb[0].mxu0
    %v2161 = vadd.f32 %v509, %v2160
    %v2162 = vpop.f32.mrb[0].mxu0
    %v2163 = vpop.f32.mrb[0].mxu0
    %2164 = vdwg.mxu0
    %2165 = vmatprep.subr.bf16.mxu0 %v1409
    %2166 = vmatpush1.bf16.msra.mxu0 %v1408
    %2167 = vmatprep.subr.bf16.mxu0 %v1441
    %2168 = vmatpush1.bf16.msra.mxu0 %v1440
    %2169 = vmatprep.subr.bf16.mxu0 %v1473
    %2170 = vmatpush1.bf16.msra.mxu0 %v1472
    %2171 = vmatprep.subr.bf16.mxu0 %v1505
    %2172 = vmatpush1.bf16.msra.mxu0 %v1504
    %2173 = vmatprep.subr.bf16.mxu0 %v1537
    %2174 = vmatpush1.bf16.msra.mxu0 %v1536
    %2175 = vmatprep.subr.bf16.mxu0 %v1569
    %2176 = vmatpush1.bf16.msra.mxu0 %v1568
    %2177 = vmatprep.subr.bf16.mxu0 %v1601
    %2178 = vmatpush1.bf16.msra.mxu0 %v1600
    %2179 = vmatprep.subr.bf16.mxu0 %v1633
    %2180 = vmatpush1.bf16.msra.mxu0 %v1632
    %2181 = vmatprep.subr.bf16.mxu0 0
    %2182 = vmatpush1.bf16.msra.mxu0 0
    %2183 = vmatprep.subr.bf16.mxu0 0
    %2184 = vmatpush1.bf16.msra.mxu0 0
    %2185 = vmatprep.subr.bf16.mxu0 0
    %2186 = vmatpush1.bf16.msra.mxu0 0
    %2187 = vmatprep.subr.bf16.mxu0 0
    %2188 = vmatpush1.bf16.msra.mxu0 0
    %2189 = vmatprep.subr.bf16.mxu0 0
    %2190 = vmatpush1.bf16.msra.mxu0 0
    %2191 = vmatprep.subr.bf16.mxu0 0
    %2192 = vmatpush1.bf16.msra.mxu0 0
    %2193 = vmatprep.subr.bf16.mxu0 0
    %2194 = vmatpush1.bf16.msra.mxu0 0
    %2195 = vmatprep.subr.bf16.mxu0 0
    %2196 = vmatpush1.bf16.msra.mxu0 0
    %2197 = vmatprep.mubr.bf16.mxu0 0
    %2198 = vmatmul.mubr.bf16.gmra.mrb[0].mxu0 %v204
    %v2199 = vpop.f32.mrb[0].mxu0
    %v2200 = vadd.f32 %v513, %v2199
    %v2201 = vpop.f32.mrb[0].mxu0
    %v2202 = vadd.f32 %v517, %v2201
    %v2203 = vpop.f32.mrb[0].mxu0
    %v2204 = vadd.f32 %v513, %v2203
    %v2205 = vpop.f32.mrb[0].mxu0
    %v2206 = vadd.f32 %v517, %v2205
    %2207 = vmatprep.mubr.bf16.mxu0 0
    %2208 = vmatmul.mubr.bf16.gmra.mrb[0].mxu0 %v205
    %v2209 = vpop.f32.mrb[0].mxu0
    %v2210 = vadd.f32 %v513, %v2209
    %v2211 = vpop.f32.mrb[0].mxu0
    %v2212 = vadd.f32 %v517, %v2211
    %v2213 = vpop.f32.mrb[0].mxu0
    %v2214 = vpop.f32.mrb[0].mxu0
    %2215 = vdwg.mxu0
    %2216 = vmatprep.subr.bf16.mxu0 %v1411
    %2217 = vmatpush1.bf16.msra.mxu0 %v1410
    %2218 = vmatprep.subr.bf16.mxu0 %v1443
    %2219 = vmatpush1.bf16.msra.mxu0 %v1442
    %2220 = vmatprep.subr.bf16.mxu0 %v1475
    %2221 = vmatpush1.bf16.msra.mxu0 %v1474
    %2222 = vmatprep.subr.bf16.mxu0 %v1507
    %2223 = vmatpush1.bf16.msra.mxu0 %v1506
    %2224 = vmatprep.subr.bf16.mxu0 %v1539
    %2225 = vmatpush1.bf16.msra.mxu0 %v1538
    %2226 = vmatprep.subr.bf16.mxu0 %v1571
    %2227 = vmatpush1.bf16.msra.mxu0 %v1570
    %2228 = vmatprep.subr.bf16.mxu0 %v1603
    %2229 = vmatpush1.bf16.msra.mxu0 %v1602
    %2230 = vmatprep.subr.bf16.mxu0 %v1635
    %2231 = vmatpush1.bf16.msra.mxu0 %v1634
    %2232 = vmatprep.subr.bf16.mxu0 0
    %2233 = vmatpush1.bf16.msra.mxu0 0
    %2234 = vmatprep.subr.bf16.mxu0 0
    %2235 = vmatpush1.bf16.msra.mxu0 0
    %2236 = vmatprep.subr.bf16.mxu0 0
    %2237 = vmatpush1.bf16.msra.mxu0 0
    %2238 = vmatprep.subr.bf16.mxu0 0
    %2239 = vmatpush1.bf16.msra.mxu0 0
    %2240 = vmatprep.subr.bf16.mxu0 0
    %2241 = vmatpush1.bf16.msra.mxu0 0
    %2242 = vmatprep.subr.bf16.mxu0 0
    %2243 = vmatpush1.bf16.msra.mxu0 0
    %2244 = vmatprep.subr.bf16.mxu0 0
    %2245 = vmatpush1.bf16.msra.mxu0 0
    %2246 = vmatprep.subr.bf16.mxu0 0
    %2247 = vmatpush1.bf16.msra.mxu0 0
    %2248 = vmatprep.mubr.bf16.mxu0 0
    %2249 = vmatmul.mubr.bf16.gmra.mrb[0].mxu0 %v204
    %v2250 = vpop.f32.mrb[0].mxu0
    %v2251 = vadd.f32 %v521, %v2250
    %v2252 = vpop.f32.mrb[0].mxu0
    %v2253 = vadd.f32 %v525, %v2252
    %v2254 = vpop.f32.mrb[0].mxu0
    %v2255 = vadd.f32 %v521, %v2254
    %v2256 = vpop.f32.mrb[0].mxu0
    %v2257 = vadd.f32 %v525, %v2256
    %2258 = vmatprep.mubr.bf16.mxu0 0
    %2259 = vmatmul.mubr.bf16.gmra.mrb[0].mxu0 %v205
    %v2260 = vpop.f32.mrb[0].mxu0
    %v2261 = vadd.f32 %v521, %v2260
    %v2262 = vpop.f32.mrb[0].mxu0
    %v2263 = vadd.f32 %v525, %v2262
    %v2264 = vpop.f32.mrb[0].mxu0
    %v2265 = vpop.f32.mrb[0].mxu0
    %2266 = vdwg.mxu0
    %2267 = vmatprep.subr.bf16.mxu0 %v1413
    %2268 = vmatpush1.bf16.msra.mxu0 %v1412
    %2269 = vmatprep.subr.bf16.mxu0 %v1445
    %2270 = vmatpush1.bf16.msra.mxu0 %v1444
    %2271 = vmatprep.subr.bf16.mxu0 %v1477
    %2272 = vmatpush1.bf16.msra.mxu0 %v1476
    %2273 = vmatprep.subr.bf16.mxu0 %v1509
    %2274 = vmatpush1.bf16.msra.mxu0 %v1508
    %2275 = vmatprep.subr.bf16.mxu0 %v1541
    %2276 = vmatpush1.bf16.msra.mxu0 %v1540
    %2277 = vmatprep.subr.bf16.mxu0 %v1573
    %2278 = vmatpush1.bf16.msra.mxu0 %v1572
    %2279 = vmatprep.subr.bf16.mxu0 %v1605
    %2280 = vmatpush1.bf16.msra.mxu0 %v1604
    %2281 = vmatprep.subr.bf16.mxu0 %v1637
    %2282 = vmatpush1.bf16.msra.mxu0 %v1636
    %2283 = vmatprep.subr.bf16.mxu0 0
    %2284 = vmatpush1.bf16.msra.mxu0 0
    %2285 = vmatprep.subr.bf16.mxu0 0
    %2286 = vmatpush1.bf16.msra.mxu0 0
    %2287 = vmatprep.subr.bf16.mxu0 0
    %2288 = vmatpush1.bf16.msra.mxu0 0
    %2289 = vmatprep.subr.bf16.mxu0 0
    %2290 = vmatpush1.bf16.msra.mxu0 0
    %2291 = vmatprep.subr.bf16.mxu0 0
    %2292 = vmatpush1.bf16.msra.mxu0 0
    %2293 = vmatprep.subr.bf16.mxu0 0
    %2294 = vmatpush1.bf16.msra.mxu0 0
    %2295 = vmatprep.subr.bf16.mxu0 0
    %2296 = vmatpush1.bf16.msra.mxu0 0
    %2297 = vmatprep.subr.bf16.mxu0 0
    %2298 = vmatpush1.bf16.msra.mxu0 0
    %2299 = vmatprep.mubr.bf16.mxu0 0
    %2300 = vmatmul.mubr.bf16.gmra.mrb[0].mxu0 %v204
    %v2301 = vpop.f32.mrb[0].mxu0
    %v2302 = vadd.f32 %v529, %v2301
    %v2303 = vpop.f32.mrb[0].mxu0
    %v2304 = vadd.f32 %v533, %v2303
    %v2305 = vpop.f32.mrb[0].mxu0
    %v2306 = vadd.f32 %v529, %v2305
    %v2307 = vpop.f32.mrb[0].mxu0
    %v2308 = vadd.f32 %v533, %v2307
    %2309 = vmatprep.mubr.bf16.mxu0 0
    %2310 = vmatmul.mubr.bf16.gmra.mrb[0].mxu0 %v205
    %v2311 = vpop.f32.mrb[0].mxu0
    %v2312 = vadd.f32 %v529, %v2311
    %v2313 = vpop.f32.mrb[0].mxu0
    %v2314 = vadd.f32 %v533, %v2313
    %v2315 = vpop.f32.mrb[0].mxu0
    %v2316 = vpop.f32.mrb[0].mxu0
    %2317 = vdwg.mxu0
    %2318 = vmatprep.subr.bf16.mxu0 %v1415
    %2319 = vmatpush1.bf16.msra.mxu0 %v1414
    %2320 = vmatprep.subr.bf16.mxu0 %v1447
    %2321 = vmatpush1.bf16.msra.mxu0 %v1446
    %2322 = vmatprep.subr.bf16.mxu0 %v1479
    %2323 = vmatpush1.bf16.msra.mxu0 %v1478
    %2324 = vmatprep.subr.bf16.mxu0 %v1511
    %2325 = vmatpush1.bf16.msra.mxu0 %v1510
    %2326 = vmatprep.subr.bf16.mxu0 %v1543
    %2327 = vmatpush1.bf16.msra.mxu0 %v1542
    %2328 = vmatprep.subr.bf16.mxu0 %v1575
    %2329 = vmatpush1.bf16.msra.mxu0 %v1574
    %2330 = vmatprep.subr.bf16.mxu0 %v1607
    %2331 = vmatpush1.bf16.msra.mxu0 %v1606
    %2332 = vmatprep.subr.bf16.mxu0 %v1639
    %2333 = vmatpush1.bf16.msra.mxu0 %v1638
    %2334 = vmatprep.subr.bf16.mxu0 0
    %2335 = vmatpush1.bf16.msra.mxu0 0
    %2336 = vmatprep.subr.bf16.mxu0 0
    %2337 = vmatpush1.bf16.msra.mxu0 0
    %2338 = vmatprep.subr.bf16.mxu0 0
    %2339 = vmatpush1.bf16.msra.mxu0 0
    %2340 = vmatprep.subr.bf16.mxu0 0
    %2341 = vmatpush1.bf16.msra.mxu0 0
    %2342 = vmatprep.subr.bf16.mxu0 0
    %2343 = vmatpush1.bf16.msra.mxu0 0
    %2344 = vmatprep.subr.bf16.mxu0 0
    %2345 = vmatpush1.bf16.msra.mxu0 0
    %2346 = vmatprep.subr.bf16.mxu0 0
    %2347 = vmatpush1.bf16.msra.mxu0 0
    %2348 = vmatprep.subr.bf16.mxu0 0
    %2349 = vmatpush1.bf16.msra.mxu0 0
    %2350 = vmatprep.mubr.bf16.mxu0 0
    %2351 = vmatmul.mubr.bf16.gmra.mrb[0].mxu0 %v204
    %v2352 = vpop.f32.mrb[0].mxu0
    %v2353 = vadd.f32 %v537, %v2352
    %v2354 = vpop.f32.mrb[0].mxu0
    %v2355 = vadd.f32 %v541, %v2354
    %v2356 = vpop.f32.mrb[0].mxu0
    %v2357 = vadd.f32 %v537, %v2356
    %v2358 = vpop.f32.mrb[0].mxu0
    %v2359 = vadd.f32 %v541, %v2358
    %2360 = vmatprep.mubr.bf16.mxu0 0
    %2361 = vmatmul.mubr.bf16.gmra.mrb[0].mxu0 %v205
    %v2362 = vpop.f32.mrb[0].mxu0
    %v2363 = vadd.f32 %v537, %v2362
    %v2364 = vpop.f32.mrb[0].mxu0
    %v2365 = vadd.f32 %v541, %v2364
    %v2366 = vpop.f32.mrb[0].mxu0
    %v2367 = vpop.f32.mrb[0].mxu0
    %2368 = vdwg.mxu0
    %2369 = vmatprep.subr.bf16.mxu0 %v1417
    %2370 = vmatpush1.bf16.msra.mxu0 %v1416
    %2371 = vmatprep.subr.bf16.mxu0 %v1449
    %2372 = vmatpush1.bf16.msra.mxu0 %v1448
    %2373 = vmatprep.subr.bf16.mxu0 %v1481
    %2374 = vmatpush1.bf16.msra.mxu0 %v1480
    %2375 = vmatprep.subr.bf16.mxu0 %v1513
    %2376 = vmatpush1.bf16.msra.mxu0 %v1512
    %2377 = vmatprep.subr.bf16.mxu0 %v1545
    %2378 = vmatpush1.bf16.msra.mxu0 %v1544
    %2379 = vmatprep.subr.bf16.mxu0 %v1577
    %2380 = vmatpush1.bf16.msra.mxu0 %v1576
    %2381 = vmatprep.subr.bf16.mxu0 %v1609
    %2382 = vmatpush1.bf16.msra.mxu0 %v1608
    %2383 = vmatprep.subr.bf16.mxu0 %v1641
    %2384 = vmatpush1.bf16.msra.mxu0 %v1640
    %2385 = vmatprep.subr.bf16.mxu0 0
    %2386 = vmatpush1.bf16.msra.mxu0 0
    %2387 = vmatprep.subr.bf16.mxu0 0
    %2388 = vmatpush1.bf16.msra.mxu0 0
    %2389 = vmatprep.subr.bf16.mxu0 0
    %2390 = vmatpush1.bf16.msra.mxu0 0
    %2391 = vmatprep.subr.bf16.mxu0 0
    %2392 = vmatpush1.bf16.msra.mxu0 0
    %2393 = vmatprep.subr.bf16.mxu0 0
    %2394 = vmatpush1.bf16.msra.mxu0 0
    %2395 = vmatprep.subr.bf16.mxu0 0
    %2396 = vmatpush1.bf16.msra.mxu0 0
    %2397 = vmatprep.subr.bf16.mxu0 0
    %2398 = vmatpush1.bf16.msra.mxu0 0
    %2399 = vmatprep.subr.bf16.mxu0 0
    %2400 = vmatpush1.bf16.msra.mxu0 0
    %2401 = vmatprep.mubr.bf16.mxu0 0
    %2402 = vmatmul.mubr.bf16.gmra.mrb[0].mxu0 %v204
    %v2403 = vpop.f32.mrb[0].mxu0
    %v2404 = vadd.f32 %v545, %v2403
    %v2405 = vpop.f32.mrb[0].mxu0
    %v2406 = vadd.f32 %v549, %v2405
    %v2407 = vpop.f32.mrb[0].mxu0
    %v2408 = vadd.f32 %v545, %v2407
    %v2409 = vpop.f32.mrb[0].mxu0
    %v2410 = vadd.f32 %v549, %v2409
    %2411 = vmatprep.mubr.bf16.mxu0 0
    %2412 = vmatmul.mubr.bf16.gmra.mrb[0].mxu0 %v205
    %v2413 = vpop.f32.mrb[0].mxu0
    %v2414 = vadd.f32 %v545, %v2413
    %v2415 = vpop.f32.mrb[0].mxu0
    %v2416 = vadd.f32 %v549, %v2415
    %v2417 = vpop.f32.mrb[0].mxu0
    %v2418 = vpop.f32.mrb[0].mxu0
    %2419 = vdwg.mxu0
    %2420 = vmatprep.subr.bf16.mxu0 %v1419
    %2421 = vmatpush1.bf16.msra.mxu0 %v1418
    %2422 = vmatprep.subr.bf16.mxu0 %v1451
    %2423 = vmatpush1.bf16.msra.mxu0 %v1450
    %2424 = vmatprep.subr.bf16.mxu0 %v1483
    %2425 = vmatpush1.bf16.msra.mxu0 %v1482
    %2426 = vmatprep.subr.bf16.mxu0 %v1515
    %2427 = vmatpush1.bf16.msra.mxu0 %v1514
    %2428 = vmatprep.subr.bf16.mxu0 %v1547
    %2429 = vmatpush1.bf16.msra.mxu0 %v1546
    %2430 = vmatprep.subr.bf16.mxu0 %v1579
    %2431 = vmatpush1.bf16.msra.mxu0 %v1578
    %2432 = vmatprep.subr.bf16.mxu0 %v1611
    %2433 = vmatpush1.bf16.msra.mxu0 %v1610
    %2434 = vmatprep.subr.bf16.mxu0 %v1643
    %2435 = vmatpush1.bf16.msra.mxu0 %v1642
    %2436 = vmatprep.subr.bf16.mxu0 0
    %2437 = vmatpush1.bf16.msra.mxu0 0
    %2438 = vmatprep.subr.bf16.mxu0 0
    %2439 = vmatpush1.bf16.msra.mxu0 0
    %2440 = vmatprep.subr.bf16.mxu0 0
    %2441 = vmatpush1.bf16.msra.mxu0 0
    %2442 = vmatprep.subr.bf16.mxu0 0
    %2443 = vmatpush1.bf16.msra.mxu0 0
    %2444 = vmatprep.subr.bf16.mxu0 0
    %2445 = vmatpush1.bf16.msra.mxu0 0
    %2446 = vmatprep.subr.bf16.mxu0 0
    %2447 = vmatpush1.bf16.msra.mxu0 0
    %2448 = vmatprep.subr.bf16.mxu0 0
    %2449 = vmatpush1.bf16.msra.mxu0 0
    %2450 = vmatprep.subr.bf16.mxu0 0
    %2451 = vmatpush1.bf16.msra.mxu0 0
    %2452 = vmatprep.mubr.bf16.mxu0 0
    %2453 = vmatmul.mubr.bf16.gmra.mrb[0].mxu0 %v204
    %v2454 = vpop.f32.mrb[0].mxu0
    %v2455 = vadd.f32 %v553, %v2454
    %v2456 = vpop.f32.mrb[0].mxu0
    %v2457 = vadd.f32 %v557, %v2456
    %v2458 = vpop.f32.mrb[0].mxu0
    %v2459 = vadd.f32 %v553, %v2458
    %v2460 = vpop.f32.mrb[0].mxu0
    %v2461 = vadd.f32 %v557, %v2460
    %2462 = vmatprep.mubr.bf16.mxu0 0
    %2463 = vmatmul.mubr.bf16.gmra.mrb[0].mxu0 %v205
    %v2464 = vpop.f32.mrb[0].mxu0
    %v2465 = vadd.f32 %v553, %v2464
    %v2466 = vpop.f32.mrb[0].mxu0
    %v2467 = vadd.f32 %v557, %v2466
    %v2468 = vpop.f32.mrb[0].mxu0
    %v2469 = vpop.f32.mrb[0].mxu0
    %2470 = vdwg.mxu0
    %2471 = vmatprep.subr.bf16.mxu0 %v1421
    %2472 = vmatpush1.bf16.msra.mxu0 %v1420
    %2473 = vmatprep.subr.bf16.mxu0 %v1453
    %2474 = vmatpush1.bf16.msra.mxu0 %v1452
    %2475 = vmatprep.subr.bf16.mxu0 %v1485
    %2476 = vmatpush1.bf16.msra.mxu0 %v1484
    %2477 = vmatprep.subr.bf16.mxu0 %v1517
    %2478 = vmatpush1.bf16.msra.mxu0 %v1516
    %2479 = vmatprep.subr.bf16.mxu0 %v1549
    %2480 = vmatpush1.bf16.msra.mxu0 %v1548
    %2481 = vmatprep.subr.bf16.mxu0 %v1581
    %2482 = vmatpush1.bf16.msra.mxu0 %v1580
    %2483 = vmatprep.subr.bf16.mxu0 %v1613
    %2484 = vmatpush1.bf16.msra.mxu0 %v1612
    %2485 = vmatprep.subr.bf16.mxu0 %v1645
    %2486 = vmatpush1.bf16.msra.mxu0 %v1644
    %2487 = vmatprep.subr.bf16.mxu0 0
    %2488 = vmatpush1.bf16.msra.mxu0 0
    %2489 = vmatprep.subr.bf16.mxu0 0
    %2490 = vmatpush1.bf16.msra.mxu0 0
    %2491 = vmatprep.subr.bf16.mxu0 0
    %2492 = vmatpush1.bf16.msra.mxu0 0
    %2493 = vmatprep.subr.bf16.mxu0 0
    %2494 = vmatpush1.bf16.msra.mxu0 0
    %2495 = vmatprep.subr.bf16.mxu0 0
    %2496 = vmatpush1.bf16.msra.mxu0 0
    %2497 = vmatprep.subr.bf16.mxu0 0
    %2498 = vmatpush1.bf16.msra.mxu0 0
    %2499 = vmatprep.subr.bf16.mxu0 0
    %2500 = vmatpush1.bf16.msra.mxu0 0
    %2501 = vmatprep.subr.bf16.mxu0 0
    %2502 = vmatpush1.bf16.msra.mxu0 0
    %2503 = vmatprep.mubr.bf16.mxu0 0
    %2504 = vmatmul.mubr.bf16.gmra.mrb[0].mxu0 %v204
    %v2505 = vpop.f32.mrb[0].mxu0
    %v2506 = vadd.f32 %v561, %v2505
    %v2507 = vpop.f32.mrb[0].mxu0
    %v2508 = vadd.f32 %v565, %v2507
    %v2509 = vpop.f32.mrb[0].mxu0
    %v2510 = vadd.f32 %v561, %v2509
    %v2511 = vpop.f32.mrb[0].mxu0
    %v2512 = vadd.f32 %v565, %v2511
    %2513 = vmatprep.mubr.bf16.mxu0 0
    %2514 = vmatmul.mubr.bf16.gmra.mrb[0].mxu0 %v205
    %v2515 = vpop.f32.mrb[0].mxu0
    %v2516 = vadd.f32 %v561, %v2515
    %v2517 = vpop.f32.mrb[0].mxu0
    %v2518 = vadd.f32 %v565, %v2517
    %v2519 = vpop.f32.mrb[0].mxu0
    %v2520 = vpop.f32.mrb[0].mxu0
    %2521 = vdwg.mxu0
    %2522 = vmatprep.subr.bf16.mxu0 %v1423
    %2523 = vmatpush1.bf16.msra.mxu0 %v1422
    %2524 = vmatprep.subr.bf16.mxu0 %v1455
    %2525 = vmatpush1.bf16.msra.mxu0 %v1454
    %2526 = vmatprep.subr.bf16.mxu0 %v1487
    %2527 = vmatpush1.bf16.msra.mxu0 %v1486
    %2528 = vmatprep.subr.bf16.mxu0 %v1519
    %2529 = vmatpush1.bf16.msra.mxu0 %v1518
    %2530 = vmatprep.subr.bf16.mxu0 %v1551
    %2531 = vmatpush1.bf16.msra.mxu0 %v1550
    %2532 = vmatprep.subr.bf16.mxu0 %v1583
    %2533 = vmatpush1.bf16.msra.mxu0 %v1582
    %2534 = vmatprep.subr.bf16.mxu0 %v1615
    %2535 = vmatpush1.bf16.msra.mxu0 %v1614
    %2536 = vmatprep.subr.bf16.mxu0 %v1647
    %2537 = vmatpush1.bf16.msra.mxu0 %v1646
    %2538 = vmatprep.subr.bf16.mxu0 0
    %2539 = vmatpush1.bf16.msra.mxu0 0
    %2540 = vmatprep.subr.bf16.mxu0 0
    %2541 = vmatpush1.bf16.msra.mxu0 0
    %2542 = vmatprep.subr.bf16.mxu0 0
    %2543 = vmatpush1.bf16.msra.mxu0 0
    %2544 = vmatprep.subr.bf16.mxu0 0
    %2545 = vmatpush1.bf16.msra.mxu0 0
    %2546 = vmatprep.subr.bf16.mxu0 0
    %2547 = vmatpush1.bf16.msra.mxu0 0
    %2548 = vmatprep.subr.bf16.mxu0 0
    %2549 = vmatpush1.bf16.msra.mxu0 0
    %2550 = vmatprep.subr.bf16.mxu0 0
    %2551 = vmatpush1.bf16.msra.mxu0 0
    %2552 = vmatprep.subr.bf16.mxu0 0
    %2553 = vmatpush1.bf16.msra.mxu0 0
    %2554 = vmatprep.mubr.bf16.mxu0 0
    %2555 = vmatmul.mubr.bf16.gmra.mrb[0].mxu0 %v204
    %v2556 = vpop.f32.mrb[0].mxu0
    %v2557 = vadd.f32 %v569, %v2556
    %v2558 = vpop.f32.mrb[0].mxu0
    %v2559 = vadd.f32 %v573, %v2558
    %v2560 = vpop.f32.mrb[0].mxu0
    %v2561 = vadd.f32 %v569, %v2560
    %v2562 = vpop.f32.mrb[0].mxu0
    %v2563 = vadd.f32 %v573, %v2562
    %2564 = vmatprep.mubr.bf16.mxu0 0
    %2565 = vmatmul.mubr.bf16.gmra.mrb[0].mxu0 %v205
    %v2566 = vpop.f32.mrb[0].mxu0
    %v2567 = vadd.f32 %v569, %v2566
    %v2568 = vpop.f32.mrb[0].mxu0
    %v2569 = vadd.f32 %v573, %v2568
    %v2570 = vpop.f32.mrb[0].mxu0
    %v2571 = vpop.f32.mrb[0].mxu0
    %2572 = vdwg.mxu0
    %2573 = vmatprep.subr.bf16.mxu0 %v1425
    %2574 = vmatpush1.bf16.msra.mxu0 %v1424
    %2575 = vmatprep.subr.bf16.mxu0 %v1457
    %2576 = vmatpush1.bf16.msra.mxu0 %v1456
    %2577 = vmatprep.subr.bf16.mxu0 %v1489
    %2578 = vmatpush1.bf16.msra.mxu0 %v1488
    %2579 = vmatprep.subr.bf16.mxu0 %v1521
    %2580 = vmatpush1.bf16.msra.mxu0 %v1520
    %2581 = vmatprep.subr.bf16.mxu0 %v1553
    %2582 = vmatpush1.bf16.msra.mxu0 %v1552
    %2583 = vmatprep.subr.bf16.mxu0 %v1585
    %2584 = vmatpush1.bf16.msra.mxu0 %v1584
    %2585 = vmatprep.subr.bf16.mxu0 %v1617
    %2586 = vmatpush1.bf16.msra.mxu0 %v1616
    %2587 = vmatprep.subr.bf16.mxu0 %v1649
    %2588 = vmatpush1.bf16.msra.mxu0 %v1648
    %2589 = vmatprep.subr.bf16.mxu0 0
    %2590 = vmatpush1.bf16.msra.mxu0 0
    %2591 = vmatprep.subr.bf16.mxu0 0
    %2592 = vmatpush1.bf16.msra.mxu0 0
    %2593 = vmatprep.subr.bf16.mxu0 0
    %2594 = vmatpush1.bf16.msra.mxu0 0
    %2595 = vmatprep.subr.bf16.mxu0 0
    %2596 = vmatpush1.bf16.msra.mxu0 0
    %2597 = vmatprep.subr.bf16.mxu0 0
    %2598 = vmatpush1.bf16.msra.mxu0 0
    %2599 = vmatprep.subr.bf16.mxu0 0
    %2600 = vmatpush1.bf16.msra.mxu0 0
    %2601 = vmatprep.subr.bf16.mxu0 0
    %2602 = vmatpush1.bf16.msra.mxu0 0
    %2603 = vmatprep.subr.bf16.mxu0 0
    %2604 = vmatpush1.bf16.msra.mxu0 0
    %2605 = vmatprep.mubr.bf16.mxu0 0
    %2606 = vmatmul.mubr.bf16.gmra.mrb[0].mxu0 %v204
    %v2607 = vpop.f32.mrb[0].mxu0
    %v2608 = vadd.f32 %v577, %v2607
    %v2609 = vpop.f32.mrb[0].mxu0
    %v2610 = vadd.f32 %v581, %v2609
    %v2611 = vpop.f32.mrb[0].mxu0
    %v2612 = vadd.f32 %v577, %v2611
    %v2613 = vpop.f32.mrb[0].mxu0
    %v2614 = vadd.f32 %v581, %v2613
    %2615 = vmatprep.mubr.bf16.mxu0 0
    %2616 = vmatmul.mubr.bf16.gmra.mrb[0].mxu0 %v205
    %v2617 = vpop.f32.mrb[0].mxu0
    %v2618 = vadd.f32 %v577, %v2617
    %v2619 = vpop.f32.mrb[0].mxu0
    %v2620 = vadd.f32 %v581, %v2619
    %v2621 = vpop.f32.mrb[0].mxu0
    %v2622 = vpop.f32.mrb[0].mxu0
    %2623 = vdwg.mxu0
    %2624 = vmatprep.subr.bf16.mxu0 %v1427
    %2625 = vmatpush1.bf16.msra.mxu0 %v1426
    %2626 = vmatprep.subr.bf16.mxu0 %v1459
    %2627 = vmatpush1.bf16.msra.mxu0 %v1458
    %2628 = vmatprep.subr.bf16.mxu0 %v1491
    %2629 = vmatpush1.bf16.msra.mxu0 %v1490
    %2630 = vmatprep.subr.bf16.mxu0 %v1523
    %2631 = vmatpush1.bf16.msra.mxu0 %v1522
    %2632 = vmatprep.subr.bf16.mxu0 %v1555
    %2633 = vmatpush1.bf16.msra.mxu0 %v1554
    %2634 = vmatprep.subr.bf16.mxu0 %v1587
    %2635 = vmatpush1.bf16.msra.mxu0 %v1586
    %2636 = vmatprep.subr.bf16.mxu0 %v1619
    %2637 = vmatpush1.bf16.msra.mxu0 %v1618
    %2638 = vmatprep.subr.bf16.mxu0 %v1651
    %2639 = vmatpush1.bf16.msra.mxu0 %v1650
    %2640 = vmatprep.subr.bf16.mxu0 0
    %2641 = vmatpush1.bf16.msra.mxu0 0
    %2642 = vmatprep.subr.bf16.mxu0 0
    %2643 = vmatpush1.bf16.msra.mxu0 0
    %2644 = vmatprep.subr.bf16.mxu0 0
    %2645 = vmatpush1.bf16.msra.mxu0 0
    %2646 = vmatprep.subr.bf16.mxu0 0
    %2647 = vmatpush1.bf16.msra.mxu0 0
    %2648 = vmatprep.subr.bf16.mxu0 0
    %2649 = vmatpush1.bf16.msra.mxu0 0
    %2650 = vmatprep.subr.bf16.mxu0 0
    %2651 = vmatpush1.bf16.msra.mxu0 0
    %2652 = vmatprep.subr.bf16.mxu0 0
    %2653 = vmatpush1.bf16.msra.mxu0 0
    %2654 = vmatprep.subr.bf16.mxu0 0
    %2655 = vmatpush1.bf16.msra.mxu0 0
    %2656 = vmatprep.mubr.bf16.mxu0 0
    %2657 = vmatmul.mubr.bf16.gmra.mrb[0].mxu0 %v204
    %v2658 = vpop.f32.mrb[0].mxu0
    %v2659 = vadd.f32 %v585, %v2658
    %v2660 = vpop.f32.mrb[0].mxu0
    %v2661 = vadd.f32 %v589, %v2660
    %v2662 = vpop.f32.mrb[0].mxu0
    %v2663 = vadd.f32 %v585, %v2662
    %v2664 = vpop.f32.mrb[0].mxu0
    %v2665 = vadd.f32 %v589, %v2664
    %2666 = vmatprep.mubr.bf16.mxu0 0
    %2667 = vmatmul.mubr.bf16.gmra.mrb[0].mxu0 %v205
    %v2668 = vpop.f32.mrb[0].mxu0
    %v2669 = vadd.f32 %v585, %v2668
    %v2670 = vpop.f32.mrb[0].mxu0
    %v2671 = vadd.f32 %v589, %v2670
    %v2672 = vpop.f32.mrb[0].mxu0
    %v2673 = vpop.f32.mrb[0].mxu0
    %2674 = vdwg.mxu0
    %2675 = vmatprep.subr.bf16.mxu0 %v1429
    %2676 = vmatpush1.bf16.msra.mxu0 %v1428
    %2677 = vmatprep.subr.bf16.mxu0 %v1461
    %2678 = vmatpush1.bf16.msra.mxu0 %v1460
    %2679 = vmatprep.subr.bf16.mxu0 %v1493
    %2680 = vmatpush1.bf16.msra.mxu0 %v1492
    %2681 = vmatprep.subr.bf16.mxu0 %v1525
    %2682 = vmatpush1.bf16.msra.mxu0 %v1524
    %2683 = vmatprep.subr.bf16.mxu0 %v1557
    %2684 = vmatpush1.bf16.msra.mxu0 %v1556
    %2685 = vmatprep.subr.bf16.mxu0 %v1589
    %2686 = vmatpush1.bf16.msra.mxu0 %v1588
    %2687 = vmatprep.subr.bf16.mxu0 %v1621
    %2688 = vmatpush1.bf16.msra.mxu0 %v1620
    %2689 = vmatprep.subr.bf16.mxu0 %v1653
    %2690 = vmatpush1.bf16.msra.mxu0 %v1652
    %2691 = vmatprep.subr.bf16.mxu0 0
    %2692 = vmatpush1.bf16.msra.mxu0 0
    %2693 = vmatprep.subr.bf16.mxu0 0
    %2694 = vmatpush1.bf16.msra.mxu0 0
    %2695 = vmatprep.subr.bf16.mxu0 0
    %2696 = vmatpush1.bf16.msra.mxu0 0
    %2697 = vmatprep.subr.bf16.mxu0 0
    %2698 = vmatpush1.bf16.msra.mxu0 0
    %2699 = vmatprep.subr.bf16.mxu0 0
    %2700 = vmatpush1.bf16.msra.mxu0 0
    %2701 = vmatprep.subr.bf16.mxu0 0
    %2702 = vmatpush1.bf16.msra.mxu0 0
    %2703 = vmatprep.subr.bf16.mxu0 0
    %2704 = vmatpush1.bf16.msra.mxu0 0
    %2705 = vmatprep.subr.bf16.mxu0 0
    %2706 = vmatpush1.bf16.msra.mxu0 0
    %2707 = vmatprep.mubr.bf16.mxu0 0
    %2708 = vmatmul.mubr.bf16.gmra.mrb[0].mxu0 %v204
    %v2709 = vpop.f32.mrb[0].mxu0
    %v2710 = vadd.f32 %v593, %v2709
    %v2711 = vpop.f32.mrb[0].mxu0
    %v2712 = vadd.f32 %v597, %v2711
    %v2713 = vpop.f32.mrb[0].mxu0
    %v2714 = vadd.f32 %v593, %v2713
    %v2715 = vpop.f32.mrb[0].mxu0
    %v2716 = vadd.f32 %v597, %v2715
    %2717 = vmatprep.mubr.bf16.mxu0 0
    %2718 = vmatmul.mubr.bf16.gmra.mrb[0].mxu0 %v205
    %v2719 = vpop.f32.mrb[0].mxu0
    %v2720 = vadd.f32 %v593, %v2719
    %v2721 = vpop.f32.mrb[0].mxu0
    %v2722 = vadd.f32 %v597, %v2721
    %v2723 = vpop.f32.mrb[0].mxu0
    %v2724 = vpop.f32.mrb[0].mxu0
    %2725 = vdwg.mxu0
    %v2726 = vpack.c.bf16 %v1949, %v1945
    %v2727 = vpack.c.bf16 %v1951, %v1947
    %v2728 = vpack.c.bf16 %v2000, %v1996
    %v2729 = vpack.c.bf16 %v2002, %v1998
    %v2730 = vpack.c.bf16 %v2051, %v2047
    %v2731 = vpack.c.bf16 %v2053, %v2049
    %v2732 = vpack.c.bf16 %v2102, %v2098
    %v2733 = vpack.c.bf16 %v2104, %v2100
    %v2734 = vpack.c.bf16 %v2153, %v2149
    %v2735 = vpack.c.bf16 %v2155, %v2151
    %v2736 = vpack.c.bf16 %v2204, %v2200
    %v2737 = vpack.c.bf16 %v2206, %v2202
    %v2738 = vpack.c.bf16 %v2255, %v2251
    %v2739 = vpack.c.bf16 %v2257, %v2253
    %v2740 = vpack.c.bf16 %v2306, %v2302
    %v2741 = vpack.c.bf16 %v2308, %v2304
    %v2742 = vpack.c.bf16 %v2357, %v2353
    %v2743 = vpack.c.bf16 %v2359, %v2355
    %v2744 = vpack.c.bf16 %v2408, %v2404
    %v2745 = vpack.c.bf16 %v2410, %v2406
    %v2746 = vpack.c.bf16 %v2459, %v2455
    %v2747 = vpack.c.bf16 %v2461, %v2457
    %v2748 = vpack.c.bf16 %v2510, %v2506
    %v2749 = vpack.c.bf16 %v2512, %v2508
    %v2750 = vpack.c.bf16 %v2561, %v2557
    %v2751 = vpack.c.bf16 %v2563, %v2559
    %v2752 = vpack.c.bf16 %v2612, %v2608
    %v2753 = vpack.c.bf16 %v2614, %v2610
    %v2754 = vpack.c.bf16 %v2663, %v2659
    %v2755 = vpack.c.bf16 %v2665, %v2661
    %v2756 = vpack.c.bf16 %v2714, %v2710
    %v2757 = vpack.c.bf16 %v2716, %v2712
    %v2758 = vpack.c.bf16 %v1955, %v1955
    %v2759 = vpack.c.bf16 %v1957, %v1957
    %v2760 = vpack.c.bf16 %v2006, %v2006
    %v2761 = vpack.c.bf16 %v2008, %v2008
    %v2762 = vpack.c.bf16 %v2057, %v2057
    %v2763 = vpack.c.bf16 %v2059, %v2059
    %v2764 = vpack.c.bf16 %v2108, %v2108
    %v2765 = vpack.c.bf16 %v2110, %v2110
    %v2766 = vpack.c.bf16 %v2159, %v2159
    %v2767 = vpack.c.bf16 %v2161, %v2161
    %v2768 = vpack.c.bf16 %v2210, %v2210
    %v2769 = vpack.c.bf16 %v2212, %v2212
    %v2770 = vpack.c.bf16 %v2261, %v2261
    %v2771 = vpack.c.bf16 %v2263, %v2263
    %v2772 = vpack.c.bf16 %v2312, %v2312
    %v2773 = vpack.c.bf16 %v2314, %v2314
    %v2774 = vpack.c.bf16 %v2363, %v2363
    %v2775 = vpack.c.bf16 %v2365, %v2365
    %v2776 = vpack.c.bf16 %v2414, %v2414
    %v2777 = vpack.c.bf16 %v2416, %v2416
    %v2778 = vpack.c.bf16 %v2465, %v2465
    %v2779 = vpack.c.bf16 %v2467, %v2467
    %v2780 = vpack.c.bf16 %v2516, %v2516
    %v2781 = vpack.c.bf16 %v2518, %v2518
    %v2782 = vpack.c.bf16 %v2567, %v2567
    %v2783 = vpack.c.bf16 %v2569, %v2569
    %v2784 = vpack.c.bf16 %v2618, %v2618
    %v2785 = vpack.c.bf16 %v2620, %v2620
    %v2786 = vpack.c.bf16 %v2669, %v2669
    %v2787 = vpack.c.bf16 %v2671, %v2671
    %v2788 = vpack.c.bf16 %v2720, %v2720
    %v2789 = vpack.c.bf16 %v2722, %v2722
    %v2854 = vunpack.c.l.b16 %v2726
    %v2855 = vunpack.c.l.b16 %v2727
    %v2856 = vunpack.c.l.b16 %v2728
    %v2857 = vunpack.c.l.b16 %v2729
    %v2858 = vunpack.c.l.b16 %v2730
    %v2859 = vunpack.c.l.b16 %v2731
    %v2860 = vunpack.c.l.b16 %v2732
    %v2861 = vunpack.c.l.b16 %v2733
    %v2862 = vunpack.c.l.b16 %v2734
    %v2863 = vunpack.c.l.b16 %v2735
    %v2864 = vunpack.c.l.b16 %v2736
    %v2865 = vunpack.c.l.b16 %v2737
    %v2866 = vunpack.c.l.b16 %v2738
    %v2867 = vunpack.c.l.b16 %v2739
    %v2868 = vunpack.c.l.b16 %v2740
    %v2869 = vunpack.c.l.b16 %v2741
    %v2870 = vunpack.c.l.b16 %v2742
    %v2871 = vunpack.c.l.b16 %v2743
    %v2872 = vunpack.c.l.b16 %v2744
    %v2873 = vunpack.c.l.b16 %v2745
    %v2874 = vunpack.c.l.b16 %v2746
    %v2875 = vunpack.c.l.b16 %v2747
    %v2876 = vunpack.c.l.b16 %v2748
    %v2877 = vunpack.c.l.b16 %v2749
    %v2878 = vunpack.c.l.b16 %v2750
    %v2879 = vunpack.c.l.b16 %v2751
    %v2880 = vunpack.c.l.b16 %v2752
    %v2881 = vunpack.c.l.b16 %v2753
    %v2882 = vunpack.c.l.b16 %v2754
    %v2883 = vunpack.c.l.b16 %v2755
    %v2884 = vunpack.c.l.b16 %v2756
    %v2885 = vunpack.c.l.b16 %v2757
    %v2886 = vunpack.c.h.b16 %v2726
    %v2887 = vunpack.c.h.b16 %v2727
    %v2888 = vunpack.c.h.b16 %v2728
    %v2889 = vunpack.c.h.b16 %v2729
    %v2890 = vunpack.c.h.b16 %v2730
    %v2891 = vunpack.c.h.b16 %v2731
    %v2892 = vunpack.c.h.b16 %v2732
    %v2893 = vunpack.c.h.b16 %v2733
    %v2894 = vunpack.c.h.b16 %v2734
    %v2895 = vunpack.c.h.b16 %v2735
    %v2896 = vunpack.c.h.b16 %v2736
    %v2897 = vunpack.c.h.b16 %v2737
    %v2898 = vunpack.c.h.b16 %v2738
    %v2899 = vunpack.c.h.b16 %v2739
    %v2900 = vunpack.c.h.b16 %v2740
    %v2901 = vunpack.c.h.b16 %v2741
    %v2902 = vunpack.c.h.b16 %v2742
    %v2903 = vunpack.c.h.b16 %v2743
    %v2904 = vunpack.c.h.b16 %v2744
    %v2905 = vunpack.c.h.b16 %v2745
    %v2906 = vunpack.c.h.b16 %v2746
    %v2907 = vunpack.c.h.b16 %v2747
    %v2908 = vunpack.c.h.b16 %v2748
    %v2909 = vunpack.c.h.b16 %v2749
    %v2910 = vunpack.c.h.b16 %v2750
    %v2911 = vunpack.c.h.b16 %v2751
    %v2912 = vunpack.c.h.b16 %v2752
    %v2913 = vunpack.c.h.b16 %v2753
    %v2914 = vunpack.c.h.b16 %v2754
    %v2915 = vunpack.c.h.b16 %v2755
    %v2916 = vunpack.c.h.b16 %v2756
    %v2917 = vunpack.c.h.b16 %v2757
    %v2918 = vunpack.c.l.b16 %v2758
    %v2919 = vunpack.c.l.b16 %v2759
    %v2920 = vunpack.c.l.b16 %v2760
    %v2921 = vunpack.c.l.b16 %v2761
    %v2922 = vunpack.c.l.b16 %v2762
    %v2923 = vunpack.c.l.b16 %v2763
    %v2924 = vunpack.c.l.b16 %v2764
    %v2925 = vunpack.c.l.b16 %v2765
    %v2926 = vunpack.c.l.b16 %v2766
    %v2927 = vunpack.c.l.b16 %v2767
    %v2928 = vunpack.c.l.b16 %v2768
    %v2929 = vunpack.c.l.b16 %v2769
    %v2930 = vunpack.c.l.b16 %v2770
    %v2931 = vunpack.c.l.b16 %v2771
    %v2932 = vunpack.c.l.b16 %v2772
    %v2933 = vunpack.c.l.b16 %v2773
    %v2934 = vunpack.c.l.b16 %v2774
    %v2935 = vunpack.c.l.b16 %v2775
    %v2936 = vunpack.c.l.b16 %v2776
    %v2937 = vunpack.c.l.b16 %v2777
    %v2938 = vunpack.c.l.b16 %v2778
    %v2939 = vunpack.c.l.b16 %v2779
    %v2940 = vunpack.c.l.b16 %v2780
    %v2941 = vunpack.c.l.b16 %v2781
    %v2942 = vunpack.c.l.b16 %v2782
    %v2943 = vunpack.c.l.b16 %v2783
    %v2944 = vunpack.c.l.b16 %v2784
    %v2945 = vunpack.c.l.b16 %v2785
    %v2946 = vunpack.c.l.b16 %v2786
    %v2947 = vunpack.c.l.b16 %v2787
    %v2948 = vunpack.c.l.b16 %v2788
    %v2949 = vunpack.c.l.b16 %v2789
    %v2950 = vpack.c.b16 %v2855, %v2854
    %v2951 = vpack.c.b16 %v2857, %v2856
    %v2952 = vpack.c.b16 %v2859, %v2858
    %v2953 = vpack.c.b16 %v2861, %v2860
    %v2954 = vpack.c.b16 %v2863, %v2862
    %v2955 = vpack.c.b16 %v2865, %v2864
    %v2956 = vpack.c.b16 %v2867, %v2866
    %v2957 = vpack.c.b16 %v2869, %v2868
    %v2958 = vpack.c.b16 %v2871, %v2870
    %v2959 = vpack.c.b16 %v2873, %v2872
    %v2960 = vpack.c.b16 %v2875, %v2874
    %v2961 = vpack.c.b16 %v2877, %v2876
    %v2962 = vpack.c.b16 %v2879, %v2878
    %v2963 = vpack.c.b16 %v2881, %v2880
    %v2964 = vpack.c.b16 %v2883, %v2882
    %v2965 = vpack.c.b16 %v2885, %v2884
    %v2966 = vpack.c.b16 %v2887, %v2886
    %v2967 = vpack.c.b16 %v2889, %v2888
    %v2968 = vpack.c.b16 %v2891, %v2890
    %v2969 = vpack.c.b16 %v2893, %v2892
    %v2970 = vpack.c.b16 %v2895, %v2894
    %v2971 = vpack.c.b16 %v2897, %v2896
    %v2972 = vpack.c.b16 %v2899, %v2898
    %v2973 = vpack.c.b16 %v2901, %v2900
    %v2974 = vpack.c.b16 %v2903, %v2902
    %v2975 = vpack.c.b16 %v2905, %v2904
    %v2976 = vpack.c.b16 %v2907, %v2906
    %v2977 = vpack.c.b16 %v2909, %v2908
    %v2978 = vpack.c.b16 %v2911, %v2910
    %v2979 = vpack.c.b16 %v2913, %v2912
    %v2980 = vpack.c.b16 %v2915, %v2914
    %v2981 = vpack.c.b16 %v2917, %v2916
    %v2982 = vpack.c.b16 %v2919, %v2918
    %v2983 = vpack.c.b16 %v2921, %v2920
    %v2984 = vpack.c.b16 %v2923, %v2922
    %v2985 = vpack.c.b16 %v2925, %v2924
    %v2986 = vpack.c.b16 %v2927, %v2926
    %v2987 = vpack.c.b16 %v2929, %v2928
    %v2988 = vpack.c.b16 %v2931, %v2930
    %v2989 = vpack.c.b16 %v2933, %v2932
    %v2990 = vpack.c.b16 %v2935, %v2934
    %v2991 = vpack.c.b16 %v2937, %v2936
    %v2992 = vpack.c.b16 %v2939, %v2938
    %v2993 = vpack.c.b16 %v2941, %v2940
    %v2994 = vpack.c.b16 %v2943, %v2942
    %v2995 = vpack.c.b16 %v2945, %v2944
    %v2996 = vpack.c.b16 %v2947, %v2946
    %v2997 = vpack.c.b16 %v2949, %v2948
    %3046 = vst [vmem:[#allocation8] sm:$0xff] %v2950
    %3047 = vst [vmem:[#allocation8 + $0x8] sm:$0xff] %v2951
    %3048 = vst [vmem:[#allocation8 + $0x10] sm:$0xff] %v2952
    %3049 = vst [vmem:[#allocation8 + $0x18] sm:$0xff] %v2953
    %3050 = vst [vmem:[#allocation8 + $0x20] sm:$0xff] %v2954
    %3051 = vst [vmem:[#allocation8 + $0x28] sm:$0xff] %v2955
    %3052 = vst [vmem:[#allocation8 + $0x30] sm:$0xff] %v2956
    %3053 = vst [vmem:[#allocation8 + $0x38] sm:$0xff] %v2957
    %3054 = vst [vmem:[#allocation8 + $0x40] sm:$0xff] %v2958
    %3055 = vst [vmem:[#allocation8 + $0x48] sm:$0xff] %v2959
    %3056 = vst [vmem:[#allocation8 + $0x50] sm:$0xff] %v2960
    %3057 = vst [vmem:[#allocation8 + $0x58] sm:$0xff] %v2961
    %3058 = vst [vmem:[#allocation8 + $0x60] sm:$0xff] %v2962
    %3059 = vst [vmem:[#allocation8 + $0x68] sm:$0xff] %v2963
    %3060 = vst [vmem:[#allocation8 + $0x70] sm:$0xff] %v2964
    %3061 = vst [vmem:[#allocation8 + $0x78] sm:$0xff] %v2965
    %3062 = vst [vmem:[#allocation8 + $0x80] sm:$0xff] %v2966
    %3063 = vst [vmem:[#allocation8 + $0x88] sm:$0xff] %v2967
    %3064 = vst [vmem:[#allocation8 + $0x90] sm:$0xff] %v2968
    %3065 = vst [vmem:[#allocation8 + $0x98] sm:$0xff] %v2969
    %3066 = vst [vmem:[#allocation8 + $0xa0] sm:$0xff] %v2970
    %3067 = vst [vmem:[#allocation8 + $0xa8] sm:$0xff] %v2971
    %3068 = vst [vmem:[#allocation8 + $0xb0] sm:$0xff] %v2972
    %3069 = vst [vmem:[#allocation8 + $0xb8] sm:$0xff] %v2973
    %3070 = vst [vmem:[#allocation8 + $0xc0] sm:$0xff] %v2974
    %3071 = vst [vmem:[#allocation8 + $0xc8] sm:$0xff] %v2975
    %3072 = vst [vmem:[#allocation8 + $0xd0] sm:$0xff] %v2976
    %3073 = vst [vmem:[#allocation8 + $0xd8] sm:$0xff] %v2977
    %3074 = vst [vmem:[#allocation8 + $0xe0] sm:$0xff] %v2978
    %3075 = vst [vmem:[#allocation8 + $0xe8] sm:$0xff] %v2979
    %3076 = vst [vmem:[#allocation8 + $0xf0] sm:$0xff] %v2980
    %3077 = vst [vmem:[#allocation8 + $0xf8] sm:$0xff] %v2981
    %3078 = vst [vmem:[#allocation8 + $0x100] sm:$0x33] %v2982
    %3079 = vst [vmem:[#allocation8 + $0x108] sm:$0x33] %v2983
    %3080 = vst [vmem:[#allocation8 + $0x110] sm:$0x33] %v2984
    %3081 = vst [vmem:[#allocation8 + $0x118] sm:$0x33] %v2985
    %3082 = vst [vmem:[#allocation8 + $0x120] sm:$0x33] %v2986
    %3083 = vst [vmem:[#allocation8 + $0x128] sm:$0x33] %v2987
    %3084 = vst [vmem:[#allocation8 + $0x130] sm:$0x33] %v2988
    %3085 = vst [vmem:[#allocation8 + $0x138] sm:$0x33] %v2989
    %3086 = vst [vmem:[#allocation8 + $0x140] sm:$0x33] %v2990
    %3087 = vst [vmem:[#allocation8 + $0x148] sm:$0x33] %v2991
    %3088 = vst [vmem:[#allocation8 + $0x150] sm:$0x33] %v2992
    %3089 = vst [vmem:[#allocation8 + $0x158] sm:$0x33] %v2993
    %3090 = vst [vmem:[#allocation8 + $0x160] sm:$0x33] %v2994
    %3091 = vst [vmem:[#allocation8 + $0x168] sm:$0x33] %v2995
    %3092 = vst [vmem:[#allocation8 + $0x170] sm:$0x33] %v2996
    %3093 = vst [vmem:[#allocation8 + $0x178] sm:$0x33] %v2997
    // Predicated region
    $region42: #{tpu_custom_call.1} parent=1 // pred_check
      _
    $region43: #{tpu_custom_call.1} parent=1 // pred_check_branch
      %3095 = sbr.rel (0) target = $region45
    $region44: #{tpu_custom_call.1} parent=1 // pred_region
      %s3097 = ssub.s32 256, 256
      %3098 = vsyncadd [#allocation4], %s3097
      %s3099 = sshll.u32 [#allocation7], 4
      %s3100 = int_to_ptr.vmem [resolvable:$true] %s3099
      %3105 = dma.vmem_to_hbm [thread:$0]  %s3100, 256, %s8, [#allocation4], 128, 128, 8
    $region45: #{tpu_custom_call.1} parent=1 // pred_fallthru
      _
    // Predicated region
    $region46: #{tpu_custom_call.1} parent=1 // pred_check
      _
    $region47: #{tpu_custom_call.1} parent=1 // pred_check_branch
      %3107 = sbr.rel (0) target = $region49
    $region48: #{tpu_custom_call.1} parent=1 // pred_region
      %s3109 = ssub.s32 6144, 6144
      %3110 = vsyncadd [#allocation9], %s3109
      %s3111 = sshll.u32 [#allocation8], 4
      %s3112 = int_to_ptr.vmem [resolvable:$true] %s3111
      %3117 = dma.vmem_to_hbm [thread:$0]  %s3112, 6144, %s9, [#allocation9], 2048, 2048, 128
    $region49: #{tpu_custom_call.1} parent=1 // pred_fallthru
      _
    // Predicated region
    $region50: #{tpu_custom_call.1} parent=1 // pred_check
      _
    $region51: #{tpu_custom_call.1} parent=1 // pred_check_branch
      %3119 = sbr.rel (0) target = $region53
    $region52: #{tpu_custom_call.1} parent=1 // pred_region
      %3120 = dma.done [#allocation4], 256
    $region53: #{tpu_custom_call.1} parent=1 // pred_fallthru
      _
    // Predicated region
    $region54: #{tpu_custom_call.1} parent=1 // pred_check
      _
    $region55: #{tpu_custom_call.1} parent=1 // pred_check_branch
      %3122 = sbr.rel (0) target = $region57
    $region56: #{tpu_custom_call.1} parent=1 // pred_region
      %3123 = dma.done [#allocation9], 6144
    $region57: #{tpu_custom_call.1} parent=1 // pred_fallthru
      _
    %3124 = vsyncpa [#allocation3], 1
    %3125 = vsyncpa [#allocation6], 1
    %3126 = vsyncpa [#allocation4], 1
    %3127 = vsyncpa [#allocation9], 1

</llo_original>
